<compile_context>
chip_gen: v7x
topology: tpu7x:2x2x1
jax: 0.10.0
libtpu: 0.0.40
codegen_flags: <defaults>
</compile_context>

<pallas_src>
import jax
import jax.numpy as jnp
from jax.experimental import pallas as pl
from jax.experimental.pallas import tpu as pltpu

LN_EPS = 1e-5
MATMUL_DTYPE = jnp.bfloat16  # MXU operand dtype (accumulation stays f32)


def _round_up(x, m):
    return (x + m - 1) // m * m


def _cdiv(a, b):
    return -(-a // b)


def _layernorm(x, g, b):
    # Variance from two independent reductions (E[x^2] - E[x]^2).
    mu = jnp.mean(x, axis=-1, keepdims=True)
    ms = jnp.mean(x * x, axis=-1, keepdims=True)
    var = ms - mu * mu
    return (x - mu) * jax.lax.rsqrt(var + LN_EPS) * g + b


def _mm(x, w_ref):
    # bf16 operands on the MXU, f32 accumulation (no-op cast if x is already bf16).
    return jnp.dot(x.astype(MATMUL_DTYPE), w_ref[...],
                   preferred_element_type=jnp.float32)


def fusion_kernel(
    v_ref, t_ref,
    # visual: fused (mean ‖ uncertainty-hidden) 1st layer, two LNs, 2nd unc. layer
    wv_cat_ref, bv_cat_ref, gv_ref, bev_ref, gvu_ref, bevu_ref, wvu2_ref, bvu2_ref,
    # transaction: same structure
    wt_cat_ref, bt_cat_ref, gt_ref, bet_ref, gtu_ref, betu_ref, wtu2_ref, btu2_ref,
    # output projection
    wo_ref, bo_ref, go_ref, beo_ref,
    # outputs: fused (f32) and the packed aux slab [vmean ‖ tmean ‖ vlogvar ‖ tlogvar]
    fused_ref, aux_ref,
):
    d = wvu2_ref.shape[0]

    # One N=2*D matmul per modality (mean branch ‖ uncertainty hidden branch).
    v_pre = _mm(v_ref[...], wv_cat_ref) + bv_cat_ref[...]
    t_pre = _mm(t_ref[...], wt_cat_ref) + bt_cat_ref[...]

    # Linear -> LayerNorm -> ReLU (Dropout = identity at eval)
    visual_mean = jnp.maximum(_layernorm(v_pre[:, :d], gv_ref[...], bev_ref[...]), 0.0)
    v_hid = jnp.maximum(_layernorm(v_pre[:, d:], gvu_ref[...], bevu_ref[...]), 0.0)
    transaction_mean = jnp.maximum(_layernorm(t_pre[:, :d], gt_ref[...], bet_ref[...]), 0.0)
    t_hid = jnp.maximum(_layernorm(t_pre[:, d:], gtu_ref[...], betu_ref[...]), 0.0)

    # Second uncertainty linears
    visual_logvar = _mm(v_hid, wvu2_ref) + bvu2_ref[...]
    transaction_logvar = _mm(t_hid, wtu2_ref) + btu2_ref[...]

    # Precision-weighted fusion as a sigmoid gate (single EUP tanh):
    #   w_t = exp(-tlv) / (exp(-vlv) + exp(-tlv)) = sigmoid(vlv - tlv)
    # Drops the module's +1e-8 denominator guard (~1e-8 relative deviation) and
    # is robust where exp(-logvar) would overflow.
    w_t = 0.5 * (jnp.tanh(0.5 * (visual_logvar - transaction_logvar)) + 1.0)
    fused = visual_mean + (transaction_mean - visual_mean) * w_t

    # Output projection: Linear -> LayerNorm -> ReLU
    fused = jnp.maximum(
        _layernorm(_mm(fused, wo_ref) + bo_ref[...], go_ref[...], beo_ref[...]), 0.0)

    fused_ref[...] = fused.astype(fused_ref.dtype)
    # One lane-dense (tb, 4*d) store for all four auxiliary outputs.
    aux_ref[...] = jnp.concatenate(
        [visual_mean, transaction_mean, visual_logvar, transaction_logvar],
        axis=-1).astype(aux_ref.dtype)


_PARAM_ORDER = (
    "wv_cat", "bv_cat", "gv", "bev", "gvu", "bevu", "wvu2", "bvu2",
    "wt_cat", "bt_cat", "gt", "bet", "gtu", "betu", "wtu2", "btu2",
    "wo", "bo", "go", "beo",
)


def pack_params(raw):
    """Fold raw f32 params into the kernel layout: per-modality first-layer
    weights concatenated to [D_in, 2*D]; matmul weights cast to bf16; biases
    and LayerNorm params kept in f32 (epilogue runs in f32)."""
    p = {}
    p["wv_cat"] = jnp.concatenate([raw["wv"], raw["wvu1"]], axis=1).astype(MATMUL_DTYPE)
    p["bv_cat"] = jnp.concatenate([raw["bv"], raw["bvu1"]], axis=1).astype(jnp.float32)
    p["gv"], p["bev"] = raw["gv"], raw["bev"]
    p["gvu"], p["bevu"] = raw["gvu1"], raw["bevu1"]
    p["wvu2"], p["bvu2"] = raw["wvu2"].astype(MATMUL_DTYPE), raw["bvu2"]
    p["wt_cat"] = jnp.concatenate([raw["wt"], raw["wtu1"]], axis=1).astype(MATMUL_DTYPE)
    p["bt_cat"] = jnp.concatenate([raw["bt"], raw["btu1"]], axis=1).astype(jnp.float32)
    p["gt"], p["bet"] = raw["gt"], raw["bet"]
    p["gtu"], p["betu"] = raw["gtu1"], raw["betu1"]
    p["wtu2"], p["btu2"] = raw["wtu2"].astype(MATMUL_DTYPE), raw["btu2"]
    p["wo"], p["bo"] = raw["wo"].astype(MATMUL_DTYPE), raw["bo"]
    p["go"], p["beo"] = raw["go"], raw["beo"]
    return p


def _vmem_limit_bytes(tb, dv, dt, d, aux_itemsize):
    in_tiles = tb * (dv + dt) * 2                        # bf16 input tiles
    out_tiles = tb * d * 4 + tb * 4 * d * aux_itemsize   # f32 fused + aux slab
    weights = ((dv + dt) * 2 * d + 3 * d * d) * 2        # bf16 matmul weights
    vectors = 40 * max(d, 128) * 4 * 8                   # 1-row params, sublane-padded
    scratch = tb * d * 4 * 16                            # f32 working set in the body
    est = 2 * (in_tiles + out_tiles + weights) + vectors + scratch
    # Estimate + headroom; capped only at v7x's physical 64 MiB per TC.
    return int(min(est + (8 << 20), 64 << 20))


def _build_call(tb, bp, dv, dt, d, param_shapes, aux_dtype):
    grid = (bp // tb,)
    x_spec = lambda dim: pl.BlockSpec((tb, dim), lambda i: (i, 0))
    in_specs = [x_spec(dv), x_spec(dt)] + [
        pl.BlockSpec(param_shapes[name], lambda i: (0, 0)) for name in _PARAM_ORDER
    ]
    out_specs = (pl.BlockSpec((tb, d), lambda i: (i, 0)),
                 pl.BlockSpec((tb, 4 * d), lambda i: (i, 0)))
    out_shape = (jax.ShapeDtypeStruct((bp, d), jnp.float32),      # fused
                 jax.ShapeDtypeStruct((bp, 4 * d), aux_dtype))    # aux slab
    return pl.pallas_call(
        fusion_kernel,
        grid=grid,
        in_specs=in_specs,
        out_specs=out_specs,
        out_shape=out_shape,
        compiler_params=pltpu.CompilerParams(
            dimension_semantics=("parallel",),
            vmem_limit_bytes=_vmem_limit_bytes(
                tb, dv, dt, d, jnp.dtype(aux_dtype).itemsize),
        ),
    )


def _choose_tile(B, block_b, sub=16):
    """Batch tile: multiple of `sub` sublanes (bf16-friendly), sized so the 1-D
    grid has an even number of steps >= 2 whenever the batch allows it
    (balances across v7x's 2 TensorCores), while staying <= block_b."""
    block_b = max(sub, _round_up(block_b, sub))
    if B <= sub:
        tb = _round_up(max(B, 1), sub)
    else:
        steps = max(2, _cdiv(B, block_b))
        if steps % 2:
            steps += 1
        tb = max(sub, _round_up(_cdiv(B, steps), sub))
    bp = _round_up(B, tb)
    return tb, bp


def bayesian_multimodal_fusion(visual, transaction, packed_params, *,
                               block_b=512, aux_dtype=jnp.bfloat16):
    """Forward pass. Returns (fused, visual_mean, transaction_mean,
    visual_logvar, transaction_logvar), each [B, fusion_dim]."""
    B, dv = visual.shape
    Bt, dt = transaction.shape
    assert B == Bt
    d = packed_params["wvu2"].shape[0]

    tb, bp = _choose_tile(B, block_b)

    # Stream activations as bf16 (halves the dominant HBM read stream).
    visual = visual.astype(MATMUL_DTYPE)
    transaction = transaction.astype(MATMUL_DTYPE)
    if bp != B:
        visual = jnp.pad(visual, ((0, bp - B), (0, 0)))
        transaction = jnp.pad(transaction, ((0, bp - B), (0, 0)))

    args = [visual, transaction] + [packed_params[name] for name in _PARAM_ORDER]
    param_shapes = {name: tuple(packed_params[name].shape) for name in _PARAM_ORDER}

    fused, aux = _build_call(tb, bp, dv, dt, d, param_shapes, aux_dtype)(*args)

    fused = fused[:B]
    aux = aux[:B]
    return (fused,
            aux[:, :d], aux[:, d:2 * d], aux[:, 2 * d:3 * d], aux[:, 3 * d:])


def init_params(key, visual_dim, transaction_dim, fusion_dim):
    """Deterministic synthetic f32 parameters, stored as x @ W + b layout
    (i.e. the transpose of nn.Linear.weight)."""
    keys = jax.random.split(key, 12)
    ki = iter(keys)

    def lin(k, d_in, d_out):
        kw, kb = jax.random.split(k)
        w = jax.random.normal(kw, (d_in, d_out), jnp.float32) / jnp.sqrt(jnp.float32(d_in))
        b = 0.1 * jax.random.normal(kb, (1, d_out), jnp.float32)
        return w, b

    def ln(k, d):
        kg, kb = jax.random.split(k)
        g = 1.0 + 0.1 * jax.random.normal(kg, (1, d), jnp.float32)
        b = 0.1 * jax.random.normal(kb, (1, d), jnp.float32)
        return g, b

    p = {}
    p["wv"], p["bv"] = lin(next(ki), visual_dim, fusion_dim)
    p["gv"], p["bev"] = ln(next(ki), fusion_dim)
    p["wt"], p["bt"] = lin(next(ki), transaction_dim, fusion_dim)
    p["gt"], p["bet"] = ln(next(ki), fusion_dim)
    p["wvu1"], p["bvu1"] = lin(next(ki), visual_dim, fusion_dim)
    p["gvu1"], p["bevu1"] = ln(next(ki), fusion_dim)
    p["wvu2"], p["bvu2"] = lin(next(ki), fusion_dim, fusion_dim)
    p["wtu1"], p["btu1"] = lin(next(ki), transaction_dim, fusion_dim)
    p["gtu1"], p["betu1"] = ln(next(ki), fusion_dim)
    p["wtu2"], p["btu2"] = lin(next(ki), fusion_dim, fusion_dim)
    p["wo"], p["bo"] = lin(next(ki), fusion_dim, fusion_dim)
    p["go"], p["beo"] = ln(next(ki), fusion_dim)
    return p


def _lnorm_exact(x, g, b):
    mu = jnp.mean(x, -1, keepdims=True)
    var = jnp.mean((x - mu) ** 2, -1, keepdims=True)
    return (x - mu) / jnp.sqrt(var + LN_EPS) * g + b


def reference_f32(visual, transaction, p):
    """Faithful f32 port of BayesianMultimodalFusion.forward (eval mode)."""
    relu = jax.nn.relu
    vm = relu(_lnorm_exact(visual @ p["wv"] + p["bv"], p["gv"], p["bev"]))
    tm = relu(_lnorm_exact(transaction @ p["wt"] + p["bt"], p["gt"], p["bet"]))
    vh = relu(_lnorm_exact(visual @ p["wvu1"] + p["bvu1"], p["gvu1"], p["bevu1"]))
    th = relu(_lnorm_exact(transaction @ p["wtu1"] + p["btu1"], p["gtu1"], p["betu1"]))
    vlv = vh @ p["wvu2"] + p["bvu2"]
    tlv = th @ p["wtu2"] + p["btu2"]
    vp, tp = jnp.exp(-vlv), jnp.exp(-tlv)
    fused = (vm * vp + tm * tp) / (vp + tp + 1e-8)
    fused = relu(_lnorm_exact(fused @ p["wo"] + p["bo"], p["go"], p["beo"]))
    return fused, vm, tm, vlv, tlv


def reference_mirror(visual, transaction, p, aux_dtype=jnp.bfloat16):
    """Pure-JAX mirror of the kernel numerics (bf16 streams/matmuls, f32
    epilogue, E[x^2]-based LN, sigmoid-gated fusion)."""
    def mm(x, w):
        return jnp.dot(x.astype(MATMUL_DTYPE), w.astype(MATMUL_DTYPE),
                       preferred_element_type=jnp.float32)

    def lnorm(x, g, b):
        mu = jnp.mean(x, -1, keepdims=True)
        ms = jnp.mean(x * x, -1, keepdims=True)
        return (x - mu) * jax.lax.rsqrt(ms - mu * mu + LN_EPS) * g + b

    relu = jax.nn.relu
    v = visual.astype(MATMUL_DTYPE)
    t = transaction.astype(MATMUL_DTYPE)
    vm = relu(lnorm(mm(v, p["wv"]) + p["bv"], p["gv"], p["bev"]))
    tm = relu(lnorm(mm(t, p["wt"]) + p["bt"], p["gt"], p["bet"]))
    vh = relu(lnorm(mm(v, p["wvu1"]) + p["bvu1"], p["gvu1"], p["bevu1"]))
    th = relu(lnorm(mm(t, p["wtu1"]) + p["btu1"], p["gtu1"], p["betu1"]))
    vlv = mm(vh, p["wvu2"]) + p["bvu2"]
    tlv = mm(th, p["wtu2"]) + p["btu2"]
    w_t = 0.5 * (jnp.tanh(0.5 * (vlv - tlv)) + 1.0)
    fused = vm + (tm - vm) * w_t
    fused = relu(lnorm(mm(fused, p["wo"]) + p["bo"], p["go"], p["beo"]))
    return (fused, vm.astype(aux_dtype), tm.astype(aux_dtype),
            vlv.astype(aux_dtype), tlv.astype(aux_dtype))


if __name__ == "__main__":
    # Small shapes; B=40 with the default block_b exercises a 2-step grid
    # (even split for v7x megacore) plus batch padding.
    B = 40
    VISUAL_DIM = 256
    TRANSACTION_DIM = 128
    FUSION_DIM = 128

    key = jax.random.PRNGKey(0)
    k_v, k_t, k_p = jax.random.split(key, 3)
    visual = jax.random.normal(k_v, (B, VISUAL_DIM), jnp.float32)
    transaction = jax.random.normal(k_t, (B, TRANSACTION_DIM), jnp.float32)

    raw = init_params(k_p, VISUAL_DIM, TRANSACTION_DIM, FUSION_DIM)
    packed = pack_params(raw)

    outs = bayesian_multimodal_fusion(visual, transaction, packed)
    outs = jax.block_until_ready(outs)

    names = ("fused", "visual_mean", "transaction_mean",
             "visual_logvar", "transaction_logvar")
    mirror = reference_mirror(visual, transaction, raw)
    faithful = reference_f32(visual, transaction, raw)

    for name, o, m, f in zip(names, outs, mirror, faithful):
        assert o.shape == (B, FUSION_DIM), (name, o.shape)
        o32 = jnp.asarray(o, jnp.float32)
        m32 = jnp.asarray(m, jnp.float32)
        f32 = jnp.asarray(f, jnp.float32)
        assert bool(jnp.all(jnp.isfinite(o32))), f"non-finite values in {name}"
        # Element-wise check vs a reference mirroring the kernel numerics
        # (tolerance covers bf16 rounding ties between MXU and XLA dots).
        assert jnp.allclose(o32, m32, atol=3e-2, rtol=3e-2), \
            f"{name}: mismatch vs kernel-mirroring reference"
        # Aggregate check vs the faithful f32 module semantics; bf16 streams
        # put the expected relative-L2 error at ~1-3%.
        rel = jnp.linalg.norm(o32 - f32) / (jnp.linalg.norm(f32) + 1e-12)
        assert float(rel) < 8e-2, f"{name}: rel-L2 {float(rel):.4f} vs f32 reference"

    print("KERNEL_OK")
</pallas_src>

<mosaic_0001>
module attributes {stable_mosaic.version = 11 : i64} {
  func.func @fusion_kernel(%arg0: i32, %arg1: memref<32x256xbf16, #tpu.memory_space<vmem>>, %arg2: memref<32x128xbf16, #tpu.memory_space<vmem>>, %arg3: memref<256x256xbf16, #tpu.memory_space<vmem>>, %arg4: memref<1x256xf32, #tpu.memory_space<vmem>>, %arg5: memref<1x128xf32, #tpu.memory_space<vmem>>, %arg6: memref<1x128xf32, #tpu.memory_space<vmem>>, %arg7: memref<1x128xf32, #tpu.memory_space<vmem>>, %arg8: memref<1x128xf32, #tpu.memory_space<vmem>>, %arg9: memref<128x128xbf16, #tpu.memory_space<vmem>>, %arg10: memref<1x128xf32, #tpu.memory_space<vmem>>, %arg11: memref<128x256xbf16, #tpu.memory_space<vmem>>, %arg12: memref<1x256xf32, #tpu.memory_space<vmem>>, %arg13: memref<1x128xf32, #tpu.memory_space<vmem>>, %arg14: memref<1x128xf32, #tpu.memory_space<vmem>>, %arg15: memref<1x128xf32, #tpu.memory_space<vmem>>, %arg16: memref<1x128xf32, #tpu.memory_space<vmem>>, %arg17: memref<128x128xbf16, #tpu.memory_space<vmem>>, %arg18: memref<1x128xf32, #tpu.memory_space<vmem>>, %arg19: memref<128x128xbf16, #tpu.memory_space<vmem>>, %arg20: memref<1x128xf32, #tpu.memory_space<vmem>>, %arg21: memref<1x128xf32, #tpu.memory_space<vmem>>, %arg22: memref<1x128xf32, #tpu.memory_space<vmem>>, %arg23: memref<32x128xf32, #tpu.memory_space<vmem>>, %arg24: memref<32x512xbf16, #tpu.memory_space<vmem>>) attributes {dimension_semantics = [#tpu.dimension_semantics<parallel>], iteration_bounds = array<i64: 2>, scalar_prefetch = 0 : i64, scratch_operands = 0 : i64, tpu.core_type = #tpu.core_type<tc>, window_params = [{transform_indices = @transform_0, window_bounds = array<i64: 32, 256>}, {transform_indices = @transform_1, window_bounds = array<i64: 32, 128>}, {pipeline_mode = #tpu.pipeline_mode<synchronous>, transform_indices = @transform_2, window_bounds = array<i64: 256, 256>}, {pipeline_mode = #tpu.pipeline_mode<synchronous>, transform_indices = @transform_3, window_bounds = array<i64: 1, 256>}, {pipeline_mode = #tpu.pipeline_mode<synchronous>, transform_indices = @transform_4, window_bounds = array<i64: 1, 128>}, {pipeline_mode = #tpu.pipeline_mode<synchronous>, transform_indices = @transform_5, window_bounds = array<i64: 1, 128>}, {pipeline_mode = #tpu.pipeline_mode<synchronous>, transform_indices = @transform_6, window_bounds = array<i64: 1, 128>}, {pipeline_mode = #tpu.pipeline_mode<synchronous>, transform_indices = @transform_7, window_bounds = array<i64: 1, 128>}, {pipeline_mode = #tpu.pipeline_mode<synchronous>, transform_indices = @transform_8, window_bounds = array<i64: 128, 128>}, {pipeline_mode = #tpu.pipeline_mode<synchronous>, transform_indices = @transform_9, window_bounds = array<i64: 1, 128>}, {pipeline_mode = #tpu.pipeline_mode<synchronous>, transform_indices = @transform_10, window_bounds = array<i64: 128, 256>}, {pipeline_mode = #tpu.pipeline_mode<synchronous>, transform_indices = @transform_11, window_bounds = array<i64: 1, 256>}, {pipeline_mode = #tpu.pipeline_mode<synchronous>, transform_indices = @transform_12, window_bounds = array<i64: 1, 128>}, {pipeline_mode = #tpu.pipeline_mode<synchronous>, transform_indices = @transform_13, window_bounds = array<i64: 1, 128>}, {pipeline_mode = #tpu.pipeline_mode<synchronous>, transform_indices = @transform_14, window_bounds = array<i64: 1, 128>}, {pipeline_mode = #tpu.pipeline_mode<synchronous>, transform_indices = @transform_15, window_bounds = array<i64: 1, 128>}, {pipeline_mode = #tpu.pipeline_mode<synchronous>, transform_indices = @transform_16, window_bounds = array<i64: 128, 128>}, {pipeline_mode = #tpu.pipeline_mode<synchronous>, transform_indices = @transform_17, window_bounds = array<i64: 1, 128>}, {pipeline_mode = #tpu.pipeline_mode<synchronous>, transform_indices = @transform_18, window_bounds = array<i64: 128, 128>}, {pipeline_mode = #tpu.pipeline_mode<synchronous>, transform_indices = @transform_19, window_bounds = array<i64: 1, 128>}, {pipeline_mode = #tpu.pipeline_mode<synchronous>, transform_indices = @transform_20, window_bounds = array<i64: 1, 128>}, {pipeline_mode = #tpu.pipeline_mode<synchronous>, transform_indices = @transform_21, window_bounds = array<i64: 1, 128>}, {transform_indices = @transform_22, window_bounds = array<i64: 32, 128>}, {transform_indices = @transform_23, window_bounds = array<i64: 32, 512>}]} {
    %c0 = arith.constant 0 : index
    %c0_0 = arith.constant 0 : index
    %0 = vector.load %arg1[%c0, %c0_0] : memref<32x256xbf16, #tpu.memory_space<vmem>>, vector<32x256xbf16>
    %c0_1 = arith.constant 0 : index
    %c0_2 = arith.constant 0 : index
    %1 = vector.load %arg3[%c0_1, %c0_2] : memref<256x256xbf16, #tpu.memory_space<vmem>>, vector<256x256xbf16>
    %cst = arith.constant dense<0.000000e+00> : vector<32x256xf32>
    %2 = tpu.matmul %0, %1, %cst {dimension_numbers = #tpu.dot_dimension_numbers<[1], [0], [0], [1], [0, 0, 1, 1], [], []>} : vector<32x256xbf16>, vector<256x256xbf16>, vector<32x256xf32> -> vector<32x256xf32>
    %c0_3 = arith.constant 0 : index
    %c0_4 = arith.constant 0 : index
    %3 = vector.load %arg4[%c0_3, %c0_4] : memref<1x256xf32, #tpu.memory_space<vmem>>, vector<1x256xf32>
    %4 = vector.broadcast %3 : vector<1x256xf32> to vector<32x256xf32>
    %5 = arith.addf %2, %4 : vector<32x256xf32>
    %c0_5 = arith.constant 0 : index
    %c0_6 = arith.constant 0 : index
    %6 = vector.load %arg2[%c0_5, %c0_6] : memref<32x128xbf16, #tpu.memory_space<vmem>>, vector<32x128xbf16>
    %c0_7 = arith.constant 0 : index
    %c0_8 = arith.constant 0 : index
    %7 = vector.load %arg11[%c0_7, %c0_8] : memref<128x256xbf16, #tpu.memory_space<vmem>>, vector<128x256xbf16>
    %cst_9 = arith.constant dense<0.000000e+00> : vector<32x256xf32>
    %8 = tpu.matmul %6, %7, %cst_9 {dimension_numbers = #tpu.dot_dimension_numbers<[1], [0], [0], [1], [0, 0, 1, 1], [], []>} : vector<32x128xbf16>, vector<128x256xbf16>, vector<32x256xf32> -> vector<32x256xf32>
    %c0_10 = arith.constant 0 : index
    %c0_11 = arith.constant 0 : index
    %9 = vector.load %arg12[%c0_10, %c0_11] : memref<1x256xf32, #tpu.memory_space<vmem>>, vector<1x256xf32>
    %10 = vector.broadcast %9 : vector<1x256xf32> to vector<32x256xf32>
    %11 = arith.addf %8, %10 : vector<32x256xf32>
    %12 = vector.extract_strided_slice %5 {offsets = [0, 0], sizes = [32, 128], strides = [1, 1]} : vector<32x256xf32> to vector<32x128xf32>
    %c0_12 = arith.constant 0 : index
    %c0_13 = arith.constant 0 : index
    %13 = vector.load %arg5[%c0_12, %c0_13] : memref<1x128xf32, #tpu.memory_space<vmem>>, vector<1x128xf32>
    %c0_14 = arith.constant 0 : index
    %c0_15 = arith.constant 0 : index
    %14 = vector.load %arg6[%c0_14, %c0_15] : memref<1x128xf32, #tpu.memory_space<vmem>>, vector<1x128xf32>
    %cst_16 = arith.constant dense<0.000000e+00> : vector<32xf32>
    %15 = vector.multi_reduction <add>, %12, %cst_16 [1] : vector<32x128xf32> to vector<32xf32>
    %16 = vector.shape_cast %15 : vector<32xf32> to vector<32x1xf32>
    %cst_17 = arith.constant 1.280000e+02 : f32
    %17 = vector.broadcast %cst_17 : f32 to vector<32x1xf32>
    %18 = arith.divf %16, %17 : vector<32x1xf32>
    %19 = arith.mulf %12, %12 : vector<32x128xf32>
    %cst_18 = arith.constant dense<0.000000e+00> : vector<32xf32>
    %20 = vector.multi_reduction <add>, %19, %cst_18 [1] : vector<32x128xf32> to vector<32xf32>
    %21 = vector.shape_cast %20 : vector<32xf32> to vector<32x1xf32>
    %cst_19 = arith.constant 1.280000e+02 : f32
    %22 = vector.broadcast %cst_19 : f32 to vector<32x1xf32>
    %23 = arith.divf %21, %22 : vector<32x1xf32>
    %24 = arith.mulf %18, %18 : vector<32x1xf32>
    %25 = arith.subf %23, %24 : vector<32x1xf32>
    %26 = vector.broadcast %18 : vector<32x1xf32> to vector<32x128xf32>
    %27 = arith.subf %12, %26 : vector<32x128xf32>
    %cst_20 = arith.constant 9.99999974E-6 : f32
    %28 = vector.broadcast %cst_20 : f32 to vector<32x1xf32>
    %29 = arith.addf %25, %28 : vector<32x1xf32>
    %30 = math.rsqrt %29 : vector<32x1xf32>
    %31 = vector.broadcast %30 : vector<32x1xf32> to vector<32x128xf32>
    %32 = arith.mulf %27, %31 : vector<32x128xf32>
    %33 = vector.broadcast %13 : vector<1x128xf32> to vector<32x128xf32>
    %34 = arith.mulf %32, %33 : vector<32x128xf32>
    %35 = vector.broadcast %14 : vector<1x128xf32> to vector<32x128xf32>
    %36 = arith.addf %34, %35 : vector<32x128xf32>
    %cst_21 = arith.constant 0.000000e+00 : f32
    %37 = vector.broadcast %cst_21 : f32 to vector<32x128xf32>
    %38 = arith.maximumf %36, %37 : vector<32x128xf32>
    %39 = vector.extract_strided_slice %5 {offsets = [0, 128], sizes = [32, 128], strides = [1, 1]} : vector<32x256xf32> to vector<32x128xf32>
    %c0_22 = arith.constant 0 : index
    %c0_23 = arith.constant 0 : index
    %40 = vector.load %arg7[%c0_22, %c0_23] : memref<1x128xf32, #tpu.memory_space<vmem>>, vector<1x128xf32>
    %c0_24 = arith.constant 0 : index
    %c0_25 = arith.constant 0 : index
    %41 = vector.load %arg8[%c0_24, %c0_25] : memref<1x128xf32, #tpu.memory_space<vmem>>, vector<1x128xf32>
    %cst_26 = arith.constant dense<0.000000e+00> : vector<32xf32>
    %42 = vector.multi_reduction <add>, %39, %cst_26 [1] : vector<32x128xf32> to vector<32xf32>
    %43 = vector.shape_cast %42 : vector<32xf32> to vector<32x1xf32>
    %cst_27 = arith.constant 1.280000e+02 : f32
    %44 = vector.broadcast %cst_27 : f32 to vector<32x1xf32>
    %45 = arith.divf %43, %44 : vector<32x1xf32>
    %46 = arith.mulf %39, %39 : vector<32x128xf32>
    %cst_28 = arith.constant dense<0.000000e+00> : vector<32xf32>
    %47 = vector.multi_reduction <add>, %46, %cst_28 [1] : vector<32x128xf32> to vector<32xf32>
    %48 = vector.shape_cast %47 : vector<32xf32> to vector<32x1xf32>
    %cst_29 = arith.constant 1.280000e+02 : f32
    %49 = vector.broadcast %cst_29 : f32 to vector<32x1xf32>
    %50 = arith.divf %48, %49 : vector<32x1xf32>
    %51 = arith.mulf %45, %45 : vector<32x1xf32>
    %52 = arith.subf %50, %51 : vector<32x1xf32>
    %53 = vector.broadcast %45 : vector<32x1xf32> to vector<32x128xf32>
    %54 = arith.subf %39, %53 : vector<32x128xf32>
    %cst_30 = arith.constant 9.99999974E-6 : f32
    %55 = vector.broadcast %cst_30 : f32 to vector<32x1xf32>
    %56 = arith.addf %52, %55 : vector<32x1xf32>
    %57 = math.rsqrt %56 : vector<32x1xf32>
    %58 = vector.broadcast %57 : vector<32x1xf32> to vector<32x128xf32>
    %59 = arith.mulf %54, %58 : vector<32x128xf32>
    %60 = vector.broadcast %40 : vector<1x128xf32> to vector<32x128xf32>
    %61 = arith.mulf %59, %60 : vector<32x128xf32>
    %62 = vector.broadcast %41 : vector<1x128xf32> to vector<32x128xf32>
    %63 = arith.addf %61, %62 : vector<32x128xf32>
    %cst_31 = arith.constant 0.000000e+00 : f32
    %64 = vector.broadcast %cst_31 : f32 to vector<32x128xf32>
    %65 = arith.maximumf %63, %64 : vector<32x128xf32>
    %66 = vector.extract_strided_slice %11 {offsets = [0, 0], sizes = [32, 128], strides = [1, 1]} : vector<32x256xf32> to vector<32x128xf32>
    %c0_32 = arith.constant 0 : index
    %c0_33 = arith.constant 0 : index
    %67 = vector.load %arg13[%c0_32, %c0_33] : memref<1x128xf32, #tpu.memory_space<vmem>>, vector<1x128xf32>
    %c0_34 = arith.constant 0 : index
    %c0_35 = arith.constant 0 : index
    %68 = vector.load %arg14[%c0_34, %c0_35] : memref<1x128xf32, #tpu.memory_space<vmem>>, vector<1x128xf32>
    %cst_36 = arith.constant dense<0.000000e+00> : vector<32xf32>
    %69 = vector.multi_reduction <add>, %66, %cst_36 [1] : vector<32x128xf32> to vector<32xf32>
    %70 = vector.shape_cast %69 : vector<32xf32> to vector<32x1xf32>
    %cst_37 = arith.constant 1.280000e+02 : f32
    %71 = vector.broadcast %cst_37 : f32 to vector<32x1xf32>
    %72 = arith.divf %70, %71 : vector<32x1xf32>
    %73 = arith.mulf %66, %66 : vector<32x128xf32>
    %cst_38 = arith.constant dense<0.000000e+00> : vector<32xf32>
    %74 = vector.multi_reduction <add>, %73, %cst_38 [1] : vector<32x128xf32> to vector<32xf32>
    %75 = vector.shape_cast %74 : vector<32xf32> to vector<32x1xf32>
    %cst_39 = arith.constant 1.280000e+02 : f32
    %76 = vector.broadcast %cst_39 : f32 to vector<32x1xf32>
    %77 = arith.divf %75, %76 : vector<32x1xf32>
    %78 = arith.mulf %72, %72 : vector<32x1xf32>
    %79 = arith.subf %77, %78 : vector<32x1xf32>
    %80 = vector.broadcast %72 : vector<32x1xf32> to vector<32x128xf32>
    %81 = arith.subf %66, %80 : vector<32x128xf32>
    %cst_40 = arith.constant 9.99999974E-6 : f32
    %82 = vector.broadcast %cst_40 : f32 to vector<32x1xf32>
    %83 = arith.addf %79, %82 : vector<32x1xf32>
    %84 = math.rsqrt %83 : vector<32x1xf32>
    %85 = vector.broadcast %84 : vector<32x1xf32> to vector<32x128xf32>
    %86 = arith.mulf %81, %85 : vector<32x128xf32>
    %87 = vector.broadcast %67 : vector<1x128xf32> to vector<32x128xf32>
    %88 = arith.mulf %86, %87 : vector<32x128xf32>
    %89 = vector.broadcast %68 : vector<1x128xf32> to vector<32x128xf32>
    %90 = arith.addf %88, %89 : vector<32x128xf32>
    %cst_41 = arith.constant 0.000000e+00 : f32
    %91 = vector.broadcast %cst_41 : f32 to vector<32x128xf32>
    %92 = arith.maximumf %90, %91 : vector<32x128xf32>
    %93 = vector.extract_strided_slice %11 {offsets = [0, 128], sizes = [32, 128], strides = [1, 1]} : vector<32x256xf32> to vector<32x128xf32>
    %c0_42 = arith.constant 0 : index
    %c0_43 = arith.constant 0 : index
    %94 = vector.load %arg15[%c0_42, %c0_43] : memref<1x128xf32, #tpu.memory_space<vmem>>, vector<1x128xf32>
    %c0_44 = arith.constant 0 : index
    %c0_45 = arith.constant 0 : index
    %95 = vector.load %arg16[%c0_44, %c0_45] : memref<1x128xf32, #tpu.memory_space<vmem>>, vector<1x128xf32>
    %cst_46 = arith.constant dense<0.000000e+00> : vector<32xf32>
    %96 = vector.multi_reduction <add>, %93, %cst_46 [1] : vector<32x128xf32> to vector<32xf32>
    %97 = vector.shape_cast %96 : vector<32xf32> to vector<32x1xf32>
    %cst_47 = arith.constant 1.280000e+02 : f32
    %98 = vector.broadcast %cst_47 : f32 to vector<32x1xf32>
    %99 = arith.divf %97, %98 : vector<32x1xf32>
    %100 = arith.mulf %93, %93 : vector<32x128xf32>
    %cst_48 = arith.constant dense<0.000000e+00> : vector<32xf32>
    %101 = vector.multi_reduction <add>, %100, %cst_48 [1] : vector<32x128xf32> to vector<32xf32>
    %102 = vector.shape_cast %101 : vector<32xf32> to vector<32x1xf32>
    %cst_49 = arith.constant 1.280000e+02 : f32
    %103 = vector.broadcast %cst_49 : f32 to vector<32x1xf32>
    %104 = arith.divf %102, %103 : vector<32x1xf32>
    %105 = arith.mulf %99, %99 : vector<32x1xf32>
    %106 = arith.subf %104, %105 : vector<32x1xf32>
    %107 = vector.broadcast %99 : vector<32x1xf32> to vector<32x128xf32>
    %108 = arith.subf %93, %107 : vector<32x128xf32>
    %cst_50 = arith.constant 9.99999974E-6 : f32
    %109 = vector.broadcast %cst_50 : f32 to vector<32x1xf32>
    %110 = arith.addf %106, %109 : vector<32x1xf32>
    %111 = math.rsqrt %110 : vector<32x1xf32>
    %112 = vector.broadcast %111 : vector<32x1xf32> to vector<32x128xf32>
    %113 = arith.mulf %108, %112 : vector<32x128xf32>
    %114 = vector.broadcast %94 : vector<1x128xf32> to vector<32x128xf32>
    %115 = arith.mulf %113, %114 : vector<32x128xf32>
    %116 = vector.broadcast %95 : vector<1x128xf32> to vector<32x128xf32>
    %117 = arith.addf %115, %116 : vector<32x128xf32>
    %cst_51 = arith.constant 0.000000e+00 : f32
    %118 = vector.broadcast %cst_51 : f32 to vector<32x128xf32>
    %119 = arith.maximumf %117, %118 : vector<32x128xf32>
    %120 = arith.truncf %65 : vector<32x128xf32> to vector<32x128xbf16>
    %c0_52 = arith.constant 0 : index
    %c0_53 = arith.constant 0 : index
    %121 = vector.load %arg9[%c0_52, %c0_53] : memref<128x128xbf16, #tpu.memory_space<vmem>>, vector<128x128xbf16>
    %cst_54 = arith.constant dense<0.000000e+00> : vector<32x128xf32>
    %122 = tpu.matmul %120, %121, %cst_54 {dimension_numbers = #tpu.dot_dimension_numbers<[1], [0], [0], [1], [0, 0, 1, 1], [], []>} : vector<32x128xbf16>, vector<128x128xbf16>, vector<32x128xf32> -> vector<32x128xf32>
    %c0_55 = arith.constant 0 : index
    %c0_56 = arith.constant 0 : index
    %123 = vector.load %arg10[%c0_55, %c0_56] : memref<1x128xf32, #tpu.memory_space<vmem>>, vector<1x128xf32>
    %124 = vector.broadcast %123 : vector<1x128xf32> to vector<32x128xf32>
    %125 = arith.addf %122, %124 : vector<32x128xf32>
    %126 = arith.truncf %119 : vector<32x128xf32> to vector<32x128xbf16>
    %c0_57 = arith.constant 0 : index
    %c0_58 = arith.constant 0 : index
    %127 = vector.load %arg17[%c0_57, %c0_58] : memref<128x128xbf16, #tpu.memory_space<vmem>>, vector<128x128xbf16>
    %cst_59 = arith.constant dense<0.000000e+00> : vector<32x128xf32>
    %128 = tpu.matmul %126, %127, %cst_59 {dimension_numbers = #tpu.dot_dimension_numbers<[1], [0], [0], [1], [0, 0, 1, 1], [], []>} : vector<32x128xbf16>, vector<128x128xbf16>, vector<32x128xf32> -> vector<32x128xf32>
    %c0_60 = arith.constant 0 : index
    %c0_61 = arith.constant 0 : index
    %129 = vector.load %arg18[%c0_60, %c0_61] : memref<1x128xf32, #tpu.memory_space<vmem>>, vector<1x128xf32>
    %130 = vector.broadcast %129 : vector<1x128xf32> to vector<32x128xf32>
    %131 = arith.addf %128, %130 : vector<32x128xf32>
    %132 = arith.subf %125, %131 : vector<32x128xf32>
    %cst_62 = arith.constant 5.000000e-01 : f32
    %133 = vector.broadcast %cst_62 : f32 to vector<32x128xf32>
    %134 = arith.mulf %133, %132 : vector<32x128xf32>
    %135 = math.tanh %134 : vector<32x128xf32>
    %cst_63 = arith.constant 1.000000e+00 : f32
    %136 = vector.broadcast %cst_63 : f32 to vector<32x128xf32>
    %137 = arith.addf %135, %136 : vector<32x128xf32>
    %cst_64 = arith.constant 5.000000e-01 : f32
    %138 = vector.broadcast %cst_64 : f32 to vector<32x128xf32>
    %139 = arith.mulf %138, %137 : vector<32x128xf32>
    %140 = arith.subf %92, %38 : vector<32x128xf32>
    %141 = arith.mulf %140, %139 : vector<32x128xf32>
    %142 = arith.addf %38, %141 : vector<32x128xf32>
    %143 = arith.truncf %142 : vector<32x128xf32> to vector<32x128xbf16>
    %c0_65 = arith.constant 0 : index
    %c0_66 = arith.constant 0 : index
    %144 = vector.load %arg19[%c0_65, %c0_66] : memref<128x128xbf16, #tpu.memory_space<vmem>>, vector<128x128xbf16>
    %cst_67 = arith.constant dense<0.000000e+00> : vector<32x128xf32>
    %145 = tpu.matmul %143, %144, %cst_67 {dimension_numbers = #tpu.dot_dimension_numbers<[1], [0], [0], [1], [0, 0, 1, 1], [], []>} : vector<32x128xbf16>, vector<128x128xbf16>, vector<32x128xf32> -> vector<32x128xf32>
    %c0_68 = arith.constant 0 : index
    %c0_69 = arith.constant 0 : index
    %146 = vector.load %arg20[%c0_68, %c0_69] : memref<1x128xf32, #tpu.memory_space<vmem>>, vector<1x128xf32>
    %147 = vector.broadcast %146 : vector<1x128xf32> to vector<32x128xf32>
    %148 = arith.addf %145, %147 : vector<32x128xf32>
    %c0_70 = arith.constant 0 : index
    %c0_71 = arith.constant 0 : index
    %149 = vector.load %arg21[%c0_70, %c0_71] : memref<1x128xf32, #tpu.memory_space<vmem>>, vector<1x128xf32>
    %c0_72 = arith.constant 0 : index
    %c0_73 = arith.constant 0 : index
    %150 = vector.load %arg22[%c0_72, %c0_73] : memref<1x128xf32, #tpu.memory_space<vmem>>, vector<1x128xf32>
    %cst_74 = arith.constant dense<0.000000e+00> : vector<32xf32>
    %151 = vector.multi_reduction <add>, %148, %cst_74 [1] : vector<32x128xf32> to vector<32xf32>
    %152 = vector.shape_cast %151 : vector<32xf32> to vector<32x1xf32>
    %cst_75 = arith.constant 1.280000e+02 : f32
    %153 = vector.broadcast %cst_75 : f32 to vector<32x1xf32>
    %154 = arith.divf %152, %153 : vector<32x1xf32>
    %155 = arith.mulf %148, %148 : vector<32x128xf32>
    %cst_76 = arith.constant dense<0.000000e+00> : vector<32xf32>
    %156 = vector.multi_reduction <add>, %155, %cst_76 [1] : vector<32x128xf32> to vector<32xf32>
    %157 = vector.shape_cast %156 : vector<32xf32> to vector<32x1xf32>
    %cst_77 = arith.constant 1.280000e+02 : f32
    %158 = vector.broadcast %cst_77 : f32 to vector<32x1xf32>
    %159 = arith.divf %157, %158 : vector<32x1xf32>
    %160 = arith.mulf %154, %154 : vector<32x1xf32>
    %161 = arith.subf %159, %160 : vector<32x1xf32>
    %162 = vector.broadcast %154 : vector<32x1xf32> to vector<32x128xf32>
    %163 = arith.subf %148, %162 : vector<32x128xf32>
    %cst_78 = arith.constant 9.99999974E-6 : f32
    %164 = vector.broadcast %cst_78 : f32 to vector<32x1xf32>
    %165 = arith.addf %161, %164 : vector<32x1xf32>
    %166 = math.rsqrt %165 : vector<32x1xf32>
    %167 = vector.broadcast %166 : vector<32x1xf32> to vector<32x128xf32>
    %168 = arith.mulf %163, %167 : vector<32x128xf32>
    %169 = vector.broadcast %149 : vector<1x128xf32> to vector<32x128xf32>
    %170 = arith.mulf %168, %169 : vector<32x128xf32>
    %171 = vector.broadcast %150 : vector<1x128xf32> to vector<32x128xf32>
    %172 = arith.addf %170, %171 : vector<32x128xf32>
    %cst_79 = arith.constant 0.000000e+00 : f32
    %173 = vector.broadcast %cst_79 : f32 to vector<32x128xf32>
    %174 = arith.maximumf %172, %173 : vector<32x128xf32>
    %c0_80 = arith.constant 0 : index
    %c0_81 = arith.constant 0 : index
    %175 = vector.load %arg23[%c0_80, %c0_81] : memref<32x128xf32, #tpu.memory_space<vmem>>, vector<32x128xf32>
    tpu.vector_store %arg23[%c0_80, %c0_81], %174 {strides = array<i32>} : memref<32x128xf32, #tpu.memory_space<vmem>>, vector<32x128xf32>,
    %176 = tpu.concatenate %38, %92, %125, %131 in 1 : vector<32x128xf32>, vector<32x128xf32>, vector<32x128xf32>, vector<32x128xf32> -> vector<32x512xf32>
    %177 = arith.truncf %176 : vector<32x512xf32> to vector<32x512xbf16>
    %c0_82 = arith.constant 0 : index
    %c0_83 = arith.constant 0 : index
    %178 = vector.load %arg24[%c0_82, %c0_83] : memref<32x512xbf16, #tpu.memory_space<vmem>>, vector<32x512xbf16>
    tpu.vector_store %arg24[%c0_82, %c0_83], %177 {strides = array<i32>} : memref<32x512xbf16, #tpu.memory_space<vmem>>, vector<32x512xbf16>,
    return
  }
  func.func @transform_0(%arg0: i32) -> (i32, i32) {
    %c0_i32 = arith.constant 0 : i32
    %c0_i32_0 = arith.constant 0 : i32
    return %arg0, %c0_i32 : i32, i32
  }
  func.func @transform_1(%arg0: i32) -> (i32, i32) {
    %c0_i32 = arith.constant 0 : i32
    %c0_i32_0 = arith.constant 0 : i32
    return %arg0, %c0_i32 : i32, i32
  }
  func.func @transform_2(%arg0: i32) -> (i32, i32) {
    %c0_i32 = arith.constant 0 : i32
    %c0_i32_0 = arith.constant 0 : i32
    %c0_i32_1 = arith.constant 0 : i32
    return %c0_i32, %c0_i32_0 : i32, i32
  }
  func.func @transform_3(%arg0: i32) -> (i32, i32) {
    %c0_i32 = arith.constant 0 : i32
    %c0_i32_0 = arith.constant 0 : i32
    %c0_i32_1 = arith.constant 0 : i32
    return %c0_i32, %c0_i32_0 : i32, i32
  }
  func.func @transform_4(%arg0: i32) -> (i32, i32) {
    %c0_i32 = arith.constant 0 : i32
    %c0_i32_0 = arith.constant 0 : i32
    %c0_i32_1 = arith.constant 0 : i32
    return %c0_i32, %c0_i32_0 : i32, i32
  }
  func.func @transform_5(%arg0: i32) -> (i32, i32) {
    %c0_i32 = arith.constant 0 : i32
    %c0_i32_0 = arith.constant 0 : i32
    %c0_i32_1 = arith.constant 0 : i32
    return %c0_i32, %c0_i32_0 : i32, i32
  }
  func.func @transform_6(%arg0: i32) -> (i32, i32) {
    %c0_i32 = arith.constant 0 : i32
    %c0_i32_0 = arith.constant 0 : i32
    %c0_i32_1 = arith.constant 0 : i32
    return %c0_i32, %c0_i32_0 : i32, i32
  }
  func.func @transform_7(%arg0: i32) -> (i32, i32) {
    %c0_i32 = arith.constant 0 : i32
    %c0_i32_0 = arith.constant 0 : i32
    %c0_i32_1 = arith.constant 0 : i32
    return %c0_i32, %c0_i32_0 : i32, i32
  }
  func.func @transform_8(%arg0: i32) -> (i32, i32) {
    %c0_i32 = arith.constant 0 : i32
    %c0_i32_0 = arith.constant 0 : i32
    %c0_i32_1 = arith.constant 0 : i32
    return %c0_i32, %c0_i32_0 : i32, i32
  }
  func.func @transform_9(%arg0: i32) -> (i32, i32) {
    %c0_i32 = arith.constant 0 : i32
    %c0_i32_0 = arith.constant 0 : i32
    %c0_i32_1 = arith.constant 0 : i32
    return %c0_i32, %c0_i32_0 : i32, i32
  }
  func.func @transform_10(%arg0: i32) -> (i32, i32) {
    %c0_i32 = arith.constant 0 : i32
    %c0_i32_0 = arith.constant 0 : i32
    %c0_i32_1 = arith.constant 0 : i32
    return %c0_i32, %c0_i32_0 : i32, i32
  }
  func.func @transform_11(%arg0: i32) -> (i32, i32) {
    %c0_i32 = arith.constant 0 : i32
    %c0_i32_0 = arith.constant 0 : i32
    %c0_i32_1 = arith.constant 0 : i32
    return %c0_i32, %c0_i32_0 : i32, i32
  }
  func.func @transform_12(%arg0: i32) -> (i32, i32) {
    %c0_i32 = arith.constant 0 : i32
    %c0_i32_0 = arith.constant 0 : i32
    %c0_i32_1 = arith.constant 0 : i32
    return %c0_i32, %c0_i32_0 : i32, i32
  }
  func.func @transform_13(%arg0: i32) -> (i32, i32) {
    %c0_i32 = arith.constant 0 : i32
    %c0_i32_0 = arith.constant 0 : i32
    %c0_i32_1 = arith.constant 0 : i32
    return %c0_i32, %c0_i32_0 : i32, i32
  }
  func.func @transform_14(%arg0: i32) -> (i32, i32) {
    %c0_i32 = arith.constant 0 : i32
    %c0_i32_0 = arith.constant 0 : i32
    %c0_i32_1 = arith.constant 0 : i32
    return %c0_i32, %c0_i32_0 : i32, i32
  }
  func.func @transform_15(%arg0: i32) -> (i32, i32) {
    %c0_i32 = arith.constant 0 : i32
    %c0_i32_0 = arith.constant 0 : i32
    %c0_i32_1 = arith.constant 0 : i32
    return %c0_i32, %c0_i32_0 : i32, i32
  }
  func.func @transform_16(%arg0: i32) -> (i32, i32) {
    %c0_i32 = arith.constant 0 : i32
    %c0_i32_0 = arith.constant 0 : i32
    %c0_i32_1 = arith.constant 0 : i32
    return %c0_i32, %c0_i32_0 : i32, i32
  }
  func.func @transform_17(%arg0: i32) -> (i32, i32) {
    %c0_i32 = arith.constant 0 : i32
    %c0_i32_0 = arith.constant 0 : i32
    %c0_i32_1 = arith.constant 0 : i32
    return %c0_i32, %c0_i32_0 : i32, i32
  }
  func.func @transform_18(%arg0: i32) -> (i32, i32) {
    %c0_i32 = arith.constant 0 : i32
    %c0_i32_0 = arith.constant 0 : i32
    %c0_i32_1 = arith.constant 0 : i32
    return %c0_i32, %c0_i32_0 : i32, i32
  }
  func.func @transform_19(%arg0: i32) -> (i32, i32) {
    %c0_i32 = arith.constant 0 : i32
    %c0_i32_0 = arith.constant 0 : i32
    %c0_i32_1 = arith.constant 0 : i32
    return %c0_i32, %c0_i32_0 : i32, i32
  }
  func.func @transform_20(%arg0: i32) -> (i32, i32) {
    %c0_i32 = arith.constant 0 : i32
    %c0_i32_0 = arith.constant 0 : i32
    %c0_i32_1 = arith.constant 0 : i32
    return %c0_i32, %c0_i32_0 : i32, i32
  }
  func.func @transform_21(%arg0: i32) -> (i32, i32) {
    %c0_i32 = arith.constant 0 : i32
    %c0_i32_0 = arith.constant 0 : i32
    %c0_i32_1 = arith.constant 0 : i32
    return %c0_i32, %c0_i32_0 : i32, i32
  }
  func.func @transform_22(%arg0: i32) -> (i32, i32) {
    %c0_i32 = arith.constant 0 : i32
    %c0_i32_0 = arith.constant 0 : i32
    return %arg0, %c0_i32 : i32, i32
  }
  func.func @transform_23(%arg0: i32) -> (i32, i32) {
    %c0_i32 = arith.constant 0 : i32
    %c0_i32_0 = arith.constant 0 : i32
    return %arg0, %c0_i32 : i32, i32
  }
}

</mosaic_0001>

<llo_original>
// kernel: tpu_custom_call.1
$region0: #{tpu_custom_call.1}
  #allocation0 [shape = 'u32[]', space=smem, size = 0x4, offset = 0x4, fixed_abs, tag = 'smem constant byte address 0x4 - core index']
  #allocation1 [shape = 'u32[144,128]{1,0:T(1,128)}', space=vmem, size = 0x12000, scoped, tag = 'internal scratch']
  %s0 = inlined_call_operand.hbm [shape: bf16[64,256], index: 0, kind: input, shape index: {}]
  %s1 = inlined_call_operand.hbm [shape: bf16[64,128], index: 1, kind: input, shape index: {}]
  %s2 = inlined_call_operand.hbm [shape: bf16[256,256], index: 2, kind: input, shape index: {}]
  %s3 = inlined_call_operand.vmem [shape: f32[1,256], index: 3, kind: input, shape index: {}]
  %s4 = inlined_call_operand.hbm [shape: f32[1,128], index: 4, kind: input, shape index: {}]
  %s5 = inlined_call_operand.hbm [shape: f32[1,128], index: 5, kind: input, shape index: {}]
  %s6 = inlined_call_operand.hbm [shape: f32[1,128], index: 6, kind: input, shape index: {}]
  %s7 = inlined_call_operand.hbm [shape: f32[1,128], index: 7, kind: input, shape index: {}]
  %s8 = inlined_call_operand.hbm [shape: bf16[128,128], index: 8, kind: input, shape index: {}]
  %s9 = inlined_call_operand.hbm [shape: f32[1,128], index: 9, kind: input, shape index: {}]
  %s10 = inlined_call_operand.hbm [shape: bf16[128,256], index: 10, kind: input, shape index: {}]
  %s11 = inlined_call_operand.vmem [shape: f32[1,256], index: 11, kind: input, shape index: {}]
  %s12 = inlined_call_operand.hbm [shape: f32[1,128], index: 12, kind: input, shape index: {}]
  %s13 = inlined_call_operand.hbm [shape: f32[1,128], index: 13, kind: input, shape index: {}]
  %s14 = inlined_call_operand.hbm [shape: f32[1,128], index: 14, kind: input, shape index: {}]
  %s15 = inlined_call_operand.hbm [shape: f32[1,128], index: 15, kind: input, shape index: {}]
  %s16 = inlined_call_operand.hbm [shape: bf16[128,128], index: 16, kind: input, shape index: {}]
  %s17 = inlined_call_operand.hbm [shape: f32[1,128], index: 17, kind: input, shape index: {}]
  %s18 = inlined_call_operand.vmem [shape: bf16[128,128], index: 18, kind: input, shape index: {}]
  %s19 = inlined_call_operand.vmem [shape: f32[1,128], index: 19, kind: input, shape index: {}]
  %s20 = inlined_call_operand.vmem [shape: f32[1,128], index: 20, kind: input, shape index: {}]
  %s21 = inlined_call_operand.vmem [shape: f32[1,128], index: 21, kind: input, shape index: {}]
  %s22 = inlined_call_operand.hbm [shape: f32[64,128], index: 22, kind: output, shape index: {0}]
  %s23 = inlined_call_operand.hbm [shape: bf16[64,512], index: 23, kind: output, shape index: {1}]
  %24 = xla_tuple %s22, %s23
  %s25 = sld [smem:[#allocation0]]
  $region193: #{tpu_custom_call.1} parent=0
    _
  %s27 = ssub.s32 1, %s25
  %s28 = scalar_select 0, %s27, %s25
  $region1: #{tpu_custom_call.1} parent=0
    #allocation2 [shape = 'u8[32768]{0}', space=vmem, size = 0x8000, scoped, tag = 'input window, operand 0']
    #allocation3 [shape = 's32[2]{0}', space=sflag, size = 0x8, scoped, tag = 'scoped memory for tpu_custom_call.1']
    #allocation4 [shape = 's32[2]{0}', space=sflag, size = 0x8, scoped, tag = 'scoped memory for tpu_custom_call.1']
    #allocation5 [shape = 'u8[16384]{0}', space=vmem, size = 0x4000, scoped, tag = 'input window, operand 1']
    #allocation6 [shape = 's32[2]{0}', space=sflag, size = 0x8, scoped, tag = 'scoped memory for tpu_custom_call.1']
    #allocation7 [shape = 'u8[131072]{0}', space=vmem, size = 0x20000, scoped, tag = 'input window, operand 2, single buffered']
    #allocation8 [shape = 'u8[512]{0}', space=vmem, size = 0x400, scoped, tag = 'input window, operand 4, single buffered']
    #allocation9 [shape = 's32[1]{0}', space=sflag, size = 0x4, scoped, tag = 'scoped memory for tpu_custom_call.1']
    #allocation10 [shape = 'u8[512]{0}', space=vmem, size = 0x400, scoped, tag = 'input window, operand 5, single buffered']
    #allocation11 [shape = 'u8[512]{0}', space=vmem, size = 0x400, scoped, tag = 'input window, operand 6, single buffered']
    #allocation12 [shape = 's32[1]{0}', space=sflag, size = 0x4, scoped, tag = 'scoped memory for tpu_custom_call.1']
    #allocation13 [shape = 'u8[512]{0}', space=vmem, size = 0x400, scoped, tag = 'input window, operand 7, single buffered']
    #allocation14 [shape = 'u8[32768]{0}', space=vmem, size = 0x8000, scoped, tag = 'input window, operand 8, single buffered']
    #allocation15 [shape = 's32[1]{0}', space=sflag, size = 0x4, scoped, tag = 'scoped memory for tpu_custom_call.1']
    #allocation16 [shape = 'u8[512]{0}', space=vmem, size = 0x400, scoped, tag = 'input window, operand 9, single buffered']
    #allocation17 [shape = 'u8[65536]{0}', space=vmem, size = 0x10000, scoped, tag = 'input window, operand 10, single buffered']
    #allocation18 [shape = 's32[1]{0}', space=sflag, size = 0x4, scoped, tag = 'scoped memory for tpu_custom_call.1']
    #allocation19 [shape = 'u8[512]{0}', space=vmem, size = 0x400, scoped, tag = 'input window, operand 12, single buffered']
    #allocation20 [shape = 'u8[512]{0}', space=vmem, size = 0x400, scoped, tag = 'input window, operand 13, single buffered']
    #allocation21 [shape = 's32[1]{0}', space=sflag, size = 0x4, scoped, tag = 'scoped memory for tpu_custom_call.1']
    #allocation22 [shape = 'u8[512]{0}', space=vmem, size = 0x400, scoped, tag = 'input window, operand 14, single buffered']
    #allocation23 [shape = 'u8[512]{0}', space=vmem, size = 0x400, scoped, tag = 'input window, operand 15, single buffered']
    #allocation24 [shape = 's32[1]{0}', space=sflag, size = 0x4, scoped, tag = 'scoped memory for tpu_custom_call.1']
    #allocation25 [shape = 'u8[32768]{0}', space=vmem, size = 0x8000, scoped, tag = 'input window, operand 16, single buffered']
    #allocation26 [shape = 'u8[512]{0}', space=vmem, size = 0x400, scoped, tag = 'input window, operand 17, single buffered']
    #allocation27 [shape = 's32[1]{0}', space=sflag, size = 0x4, scoped, tag = 'scoped memory for tpu_custom_call.1']
    #allocation28 [shape = 'u8[32768]{0}', space=vmem, size = 0x8000, scoped, tag = 'output window, operand 0']
    #allocation29 [shape = 'u8[65536]{0}', space=vmem, size = 0x10000, scoped, tag = 'output window, operand 1']
    #allocation30 [shape = 's32[2]{0}', space=sflag, size = 0x8, scoped, tag = 'scoped memory for tpu_custom_call.1']
    %29 = vsyncpa [#allocation3], 0
    %s30 = scalar_lea.sflag [#allocation3], 1
    %31 = vsyncpa %s30, 0
    %32 = vsyncpa [#allocation6], 0
    %s33 = scalar_lea.sflag [#allocation6], 1
    %34 = vsyncpa %s33, 0
    %35 = vsyncpa [#allocation9], 0
    %36 = vsyncpa [#allocation12], 0
    %37 = vsyncpa [#allocation15], 0
    %38 = vsyncpa [#allocation18], 0
    %39 = vsyncpa [#allocation21], 0
    %40 = vsyncpa [#allocation24], 0
    %41 = vsyncpa [#allocation27], 0
    %42 = vsyncpa [#allocation4], 0
    %s43 = scalar_lea.sflag [#allocation4], 1
    %44 = vsyncpa %s43, 0
    %45 = vsyncpa [#allocation30], 0
    %s46 = scalar_lea.sflag [#allocation30], 1
    %47 = vsyncpa %s46, 0
    loop: start=0, step=1, limit=4
    $region2: #{tpu_custom_call.1} parent=1 // loop_pre_header
      _
    $region3: #{tpu_custom_call.1} parent=1 // loop_header
      %s49 = sphi 0, %s53
      %p50 = scmp.ge.s32.totalorder %s49, 4
      %s59 = sphi 0, %s61
      %s62 = sphi 0, %s59
      %s63 = sphi 0, %s62
      %s79 = sphi 0, %s63
      %s85 = sphi 0, %s87
      %s88 = sphi 0, %s85
      %s89 = sphi 0, %s88
      %s105 = sphi 0, %s89
      %s109 = sphi 0, %s109
      %s111 = sphi 0, %s109
      %s112 = sphi 0, %s111
      %s126 = sphi 0, %s112
      %s130 = sphi 0, %s130
      %s132 = sphi 0, %s130
      %s133 = sphi 0, %s132
      %s147 = sphi 0, %s133
      %s151 = sphi 0, %s151
      %s153 = sphi 0, %s151
      %s154 = sphi 0, %s153
      %s168 = sphi 0, %s154
      %s172 = sphi 0, %s172
      %s174 = sphi 0, %s172
      %s175 = sphi 0, %s174
      %s189 = sphi 0, %s175
      %s193 = sphi 0, %s193
      %s195 = sphi 0, %s193
      %s196 = sphi 0, %s195
      %s210 = sphi 0, %s196
      %s214 = sphi 0, %s214
      %s216 = sphi 0, %s214
      %s217 = sphi 0, %s216
      %s231 = sphi 0, %s217
      %s235 = sphi 0, %s235
      %s237 = sphi 0, %s235
      %s238 = sphi 0, %s237
      %s252 = sphi 0, %s238
      %s256 = sphi 0, %s256
      %s258 = sphi 0, %s256
      %s259 = sphi 0, %s258
      %s273 = sphi 0, %s259
      %s277 = sphi 0, %s277
      %s279 = sphi 0, %s277
      %s280 = sphi 0, %s279
      %s294 = sphi 0, %s280
      %s298 = sphi 0, %s298
      %s300 = sphi 0, %s298
      %s301 = sphi 0, %s300
      %s315 = sphi 0, %s301
      %s319 = sphi 0, %s319
      %s321 = sphi 0, %s319
      %s322 = sphi 0, %s321
      %s336 = sphi 0, %s322
      %s340 = sphi 0, %s340
      %s342 = sphi 0, %s340
      %s343 = sphi 0, %s342
      %s357 = sphi 0, %s343
      %s361 = sphi 0, %s361
      %s363 = sphi 0, %s361
      %s364 = sphi 0, %s363
      %s378 = sphi 0, %s364
      %s382 = sphi 0, %s382
      %s384 = sphi 0, %s382
      %s385 = sphi 0, %s384
      %s399 = sphi 0, %s385
      %s403 = sphi 0, %s403
      %s405 = sphi 0, %s403
      %s406 = sphi 0, %s405
      %s420 = sphi 0, %s406
      %s424 = sphi 0, %s424
      %s426 = sphi 0, %s424
      %s427 = sphi 0, %s426
      %s441 = sphi 0, %s427
      %s445 = sphi 0, %s445
      %s447 = sphi 0, %s445
      %s448 = sphi 0, %s447
      %s462 = sphi 0, %s448
      %s466 = sphi 0, %s466
      %s468 = sphi 0, %s466
      %s469 = sphi 0, %s468
      %s483 = sphi 0, %s469
      %s487 = sphi 0, %s487
      %s489 = sphi 0, %s487
      %s490 = sphi 0, %s489
      %s504 = sphi 0, %s490
      %s508 = sphi 0, %s508
      %s510 = sphi 0, %s508
      %s511 = sphi 0, %s510
      %s525 = sphi 0, %s511
      %s531 = sphi 0, %s533
      %s534 = sphi 0, %s531
      %s535 = sphi 0, %s534
      %s551 = sphi 0, %s535
      %s557 = sphi 0, %s559
      %s560 = sphi 0, %s557
      %s561 = sphi 0, %s560
      %s577 = sphi 0, %s561
    $region4: #{tpu_custom_call.1} parent=1 // loop_header_branch
      %52 = sbr.rel (%p50) target = $region8
    $region5: #{tpu_custom_call.1} parent=1 // loop_body
      %s54 = ssub.s32 %s49, 1
      %s55 = ssub.s32 %s49, 2
      %s56 = sadd.s32 %s49, 1
      %s57 = ssub.s32 %s49, %s56
      %p58 = scmp.eq.s32.totalorder %s57, 0
      %s60 = sadd.s32 %s59, 1
      %s61 = scalar_select %p58, %s59, %s60
      %p64 = pneg %p58
      %p65 = scmp.eq.s32.totalorder %s49, 1
      %p66 = por %p64, %p65
      %p67 = scmp.ne.s32.totalorder %s59, %s62
      %p68 = scmp.eq.s32.totalorder %s49, 0
      %p69 = por %p67, %p68
      %p70 = scmp.ne.s32.totalorder %s59, %s62
      %p71 = scmp.eq.s32.totalorder %s54, 1
      %p72 = por %p70, %p71
      %p73 = scmp.ne.s32.totalorder %s62, %s63
      %p74 = scmp.eq.s32.totalorder %s54, 0
      %p75 = por %p73, %p74
      %p76 = scmp.ne.s32.totalorder %s62, %s63
      %p77 = scmp.eq.s32.totalorder %s55, 1
      %p78 = por %p76, %p77
      %p80 = scmp.ne.s32.totalorder %s63, %s79
      %p81 = scmp.eq.s32.totalorder %s55, 0
      %p82 = por %p80, %p81
      %s83 = ssub.s32 %s49, %s56
      %p84 = scmp.eq.s32.totalorder %s83, 0
      %s86 = sadd.s32 %s85, 1
      %s87 = scalar_select %p84, %s85, %s86
      %p90 = pneg %p84
      %p91 = scmp.eq.s32.totalorder %s49, 1
      %p92 = por %p90, %p91
      %p93 = scmp.ne.s32.totalorder %s85, %s88
      %p94 = scmp.eq.s32.totalorder %s49, 0
      %p95 = por %p93, %p94
      %p96 = scmp.ne.s32.totalorder %s85, %s88
      %p97 = scmp.eq.s32.totalorder %s54, 1
      %p98 = por %p96, %p97
      %p99 = scmp.ne.s32.totalorder %s88, %s89
      %p100 = scmp.eq.s32.totalorder %s54, 0
      %p101 = por %p99, %p100
      %p102 = scmp.ne.s32.totalorder %s88, %s89
      %p103 = scmp.eq.s32.totalorder %s55, 1
      %p104 = por %p102, %p103
      %p106 = scmp.ne.s32.totalorder %s89, %s105
      %p107 = scmp.eq.s32.totalorder %s55, 0
      %p108 = por %p106, %p107
      %s110 = sadd.s32 %s109, 1
      %p113 = scmp.eq.s32.totalorder %s49, 1
      %p114 = scmp.ne.s32.totalorder %s109, %s111
      %p115 = scmp.eq.s32.totalorder %s49, 0
      %p116 = por %p114, %p115
      %p117 = scmp.ne.s32.totalorder %s109, %s111
      %p118 = scmp.eq.s32.totalorder %s54, 1
      %p119 = por %p117, %p118
      %p120 = scmp.ne.s32.totalorder %s111, %s112
      %p121 = scmp.eq.s32.totalorder %s54, 0
      %p122 = por %p120, %p121
      %p123 = scmp.ne.s32.totalorder %s111, %s112
      %p124 = scmp.eq.s32.totalorder %s55, 1
      %p125 = por %p123, %p124
      %p127 = scmp.ne.s32.totalorder %s112, %s126
      %p128 = scmp.eq.s32.totalorder %s55, 0
      %p129 = por %p127, %p128
      %s131 = sadd.s32 %s130, 1
      %p134 = scmp.eq.s32.totalorder %s49, 1
      %p135 = scmp.ne.s32.totalorder %s130, %s132
      %p136 = scmp.eq.s32.totalorder %s49, 0
      %p137 = por %p135, %p136
      %p138 = scmp.ne.s32.totalorder %s130, %s132
      %p139 = scmp.eq.s32.totalorder %s54, 1
      %p140 = por %p138, %p139
      %p141 = scmp.ne.s32.totalorder %s132, %s133
      %p142 = scmp.eq.s32.totalorder %s54, 0
      %p143 = por %p141, %p142
      %p144 = scmp.ne.s32.totalorder %s132, %s133
      %p145 = scmp.eq.s32.totalorder %s55, 1
      %p146 = por %p144, %p145
      %p148 = scmp.ne.s32.totalorder %s133, %s147
      %p149 = scmp.eq.s32.totalorder %s55, 0
      %p150 = por %p148, %p149
      %s152 = sadd.s32 %s151, 1
      %p155 = scmp.eq.s32.totalorder %s49, 1
      %p156 = scmp.ne.s32.totalorder %s151, %s153
      %p157 = scmp.eq.s32.totalorder %s49, 0
      %p158 = por %p156, %p157
      %p159 = scmp.ne.s32.totalorder %s151, %s153
      %p160 = scmp.eq.s32.totalorder %s54, 1
      %p161 = por %p159, %p160
      %p162 = scmp.ne.s32.totalorder %s153, %s154
      %p163 = scmp.eq.s32.totalorder %s54, 0
      %p164 = por %p162, %p163
      %p165 = scmp.ne.s32.totalorder %s153, %s154
      %p166 = scmp.eq.s32.totalorder %s55, 1
      %p167 = por %p165, %p166
      %p169 = scmp.ne.s32.totalorder %s154, %s168
      %p170 = scmp.eq.s32.totalorder %s55, 0
      %p171 = por %p169, %p170
      %s173 = sadd.s32 %s172, 1
      %p176 = scmp.eq.s32.totalorder %s49, 1
      %p177 = scmp.ne.s32.totalorder %s172, %s174
      %p178 = scmp.eq.s32.totalorder %s49, 0
      %p179 = por %p177, %p178
      %p180 = scmp.ne.s32.totalorder %s172, %s174
      %p181 = scmp.eq.s32.totalorder %s54, 1
      %p182 = por %p180, %p181
      %p183 = scmp.ne.s32.totalorder %s174, %s175
      %p184 = scmp.eq.s32.totalorder %s54, 0
      %p185 = por %p183, %p184
      %p186 = scmp.ne.s32.totalorder %s174, %s175
      %p187 = scmp.eq.s32.totalorder %s55, 1
      %p188 = por %p186, %p187
      %p190 = scmp.ne.s32.totalorder %s175, %s189
      %p191 = scmp.eq.s32.totalorder %s55, 0
      %p192 = por %p190, %p191
      %s194 = sadd.s32 %s193, 1
      %p197 = scmp.eq.s32.totalorder %s49, 1
      %p198 = scmp.ne.s32.totalorder %s193, %s195
      %p199 = scmp.eq.s32.totalorder %s49, 0
      %p200 = por %p198, %p199
      %p201 = scmp.ne.s32.totalorder %s193, %s195
      %p202 = scmp.eq.s32.totalorder %s54, 1
      %p203 = por %p201, %p202
      %p204 = scmp.ne.s32.totalorder %s195, %s196
      %p205 = scmp.eq.s32.totalorder %s54, 0
      %p206 = por %p204, %p205
      %p207 = scmp.ne.s32.totalorder %s195, %s196
      %p208 = scmp.eq.s32.totalorder %s55, 1
      %p209 = por %p207, %p208
      %p211 = scmp.ne.s32.totalorder %s196, %s210
      %p212 = scmp.eq.s32.totalorder %s55, 0
      %p213 = por %p211, %p212
      %s215 = sadd.s32 %s214, 1
      %p218 = scmp.eq.s32.totalorder %s49, 1
      %p219 = scmp.ne.s32.totalorder %s214, %s216
      %p220 = scmp.eq.s32.totalorder %s49, 0
      %p221 = por %p219, %p220
      %p222 = scmp.ne.s32.totalorder %s214, %s216
      %p223 = scmp.eq.s32.totalorder %s54, 1
      %p224 = por %p222, %p223
      %p225 = scmp.ne.s32.totalorder %s216, %s217
      %p226 = scmp.eq.s32.totalorder %s54, 0
      %p227 = por %p225, %p226
      %p228 = scmp.ne.s32.totalorder %s216, %s217
      %p229 = scmp.eq.s32.totalorder %s55, 1
      %p230 = por %p228, %p229
      %p232 = scmp.ne.s32.totalorder %s217, %s231
      %p233 = scmp.eq.s32.totalorder %s55, 0
      %p234 = por %p232, %p233
      %s236 = sadd.s32 %s235, 1
      %p239 = scmp.eq.s32.totalorder %s49, 1
      %p240 = scmp.ne.s32.totalorder %s235, %s237
      %p241 = scmp.eq.s32.totalorder %s49, 0
      %p242 = por %p240, %p241
      %p243 = scmp.ne.s32.totalorder %s235, %s237
      %p244 = scmp.eq.s32.totalorder %s54, 1
      %p245 = por %p243, %p244
      %p246 = scmp.ne.s32.totalorder %s237, %s238
      %p247 = scmp.eq.s32.totalorder %s54, 0
      %p248 = por %p246, %p247
      %p249 = scmp.ne.s32.totalorder %s237, %s238
      %p250 = scmp.eq.s32.totalorder %s55, 1
      %p251 = por %p249, %p250
      %p253 = scmp.ne.s32.totalorder %s238, %s252
      %p254 = scmp.eq.s32.totalorder %s55, 0
      %p255 = por %p253, %p254
      %s257 = sadd.s32 %s256, 1
      %p260 = scmp.eq.s32.totalorder %s49, 1
      %p261 = scmp.ne.s32.totalorder %s256, %s258
      %p262 = scmp.eq.s32.totalorder %s49, 0
      %p263 = por %p261, %p262
      %p264 = scmp.ne.s32.totalorder %s256, %s258
      %p265 = scmp.eq.s32.totalorder %s54, 1
      %p266 = por %p264, %p265
      %p267 = scmp.ne.s32.totalorder %s258, %s259
      %p268 = scmp.eq.s32.totalorder %s54, 0
      %p269 = por %p267, %p268
      %p270 = scmp.ne.s32.totalorder %s258, %s259
      %p271 = scmp.eq.s32.totalorder %s55, 1
      %p272 = por %p270, %p271
      %p274 = scmp.ne.s32.totalorder %s259, %s273
      %p275 = scmp.eq.s32.totalorder %s55, 0
      %p276 = por %p274, %p275
      %s278 = sadd.s32 %s277, 1
      %p281 = scmp.eq.s32.totalorder %s49, 1
      %p282 = scmp.ne.s32.totalorder %s277, %s279
      %p283 = scmp.eq.s32.totalorder %s49, 0
      %p284 = por %p282, %p283
      %p285 = scmp.ne.s32.totalorder %s277, %s279
      %p286 = scmp.eq.s32.totalorder %s54, 1
      %p287 = por %p285, %p286
      %p288 = scmp.ne.s32.totalorder %s279, %s280
      %p289 = scmp.eq.s32.totalorder %s54, 0
      %p290 = por %p288, %p289
      %p291 = scmp.ne.s32.totalorder %s279, %s280
      %p292 = scmp.eq.s32.totalorder %s55, 1
      %p293 = por %p291, %p292
      %p295 = scmp.ne.s32.totalorder %s280, %s294
      %p296 = scmp.eq.s32.totalorder %s55, 0
      %p297 = por %p295, %p296
      %s299 = sadd.s32 %s298, 1
      %p302 = scmp.eq.s32.totalorder %s49, 1
      %p303 = scmp.ne.s32.totalorder %s298, %s300
      %p304 = scmp.eq.s32.totalorder %s49, 0
      %p305 = por %p303, %p304
      %p306 = scmp.ne.s32.totalorder %s298, %s300
      %p307 = scmp.eq.s32.totalorder %s54, 1
      %p308 = por %p306, %p307
      %p309 = scmp.ne.s32.totalorder %s300, %s301
      %p310 = scmp.eq.s32.totalorder %s54, 0
      %p311 = por %p309, %p310
      %p312 = scmp.ne.s32.totalorder %s300, %s301
      %p313 = scmp.eq.s32.totalorder %s55, 1
      %p314 = por %p312, %p313
      %p316 = scmp.ne.s32.totalorder %s301, %s315
      %p317 = scmp.eq.s32.totalorder %s55, 0
      %p318 = por %p316, %p317
      %s320 = sadd.s32 %s319, 1
      %p323 = scmp.eq.s32.totalorder %s49, 1
      %p324 = scmp.ne.s32.totalorder %s319, %s321
      %p325 = scmp.eq.s32.totalorder %s49, 0
      %p326 = por %p324, %p325
      %p327 = scmp.ne.s32.totalorder %s319, %s321
      %p328 = scmp.eq.s32.totalorder %s54, 1
      %p329 = por %p327, %p328
      %p330 = scmp.ne.s32.totalorder %s321, %s322
      %p331 = scmp.eq.s32.totalorder %s54, 0
      %p332 = por %p330, %p331
      %p333 = scmp.ne.s32.totalorder %s321, %s322
      %p334 = scmp.eq.s32.totalorder %s55, 1
      %p335 = por %p333, %p334
      %p337 = scmp.ne.s32.totalorder %s322, %s336
      %p338 = scmp.eq.s32.totalorder %s55, 0
      %p339 = por %p337, %p338
      %s341 = sadd.s32 %s340, 1
      %p344 = scmp.eq.s32.totalorder %s49, 1
      %p345 = scmp.ne.s32.totalorder %s340, %s342
      %p346 = scmp.eq.s32.totalorder %s49, 0
      %p347 = por %p345, %p346
      %p348 = scmp.ne.s32.totalorder %s340, %s342
      %p349 = scmp.eq.s32.totalorder %s54, 1
      %p350 = por %p348, %p349
      %p351 = scmp.ne.s32.totalorder %s342, %s343
      %p352 = scmp.eq.s32.totalorder %s54, 0
      %p353 = por %p351, %p352
      %p354 = scmp.ne.s32.totalorder %s342, %s343
      %p355 = scmp.eq.s32.totalorder %s55, 1
      %p356 = por %p354, %p355
      %p358 = scmp.ne.s32.totalorder %s343, %s357
      %p359 = scmp.eq.s32.totalorder %s55, 0
      %p360 = por %p358, %p359
      %s362 = sadd.s32 %s361, 1
      %p365 = scmp.eq.s32.totalorder %s49, 1
      %p366 = scmp.ne.s32.totalorder %s361, %s363
      %p367 = scmp.eq.s32.totalorder %s49, 0
      %p368 = por %p366, %p367
      %p369 = scmp.ne.s32.totalorder %s361, %s363
      %p370 = scmp.eq.s32.totalorder %s54, 1
      %p371 = por %p369, %p370
      %p372 = scmp.ne.s32.totalorder %s363, %s364
      %p373 = scmp.eq.s32.totalorder %s54, 0
      %p374 = por %p372, %p373
      %p375 = scmp.ne.s32.totalorder %s363, %s364
      %p376 = scmp.eq.s32.totalorder %s55, 1
      %p377 = por %p375, %p376
      %p379 = scmp.ne.s32.totalorder %s364, %s378
      %p380 = scmp.eq.s32.totalorder %s55, 0
      %p381 = por %p379, %p380
      %s383 = sadd.s32 %s382, 1
      %p386 = scmp.eq.s32.totalorder %s49, 1
      %p387 = scmp.ne.s32.totalorder %s382, %s384
      %p388 = scmp.eq.s32.totalorder %s49, 0
      %p389 = por %p387, %p388
      %p390 = scmp.ne.s32.totalorder %s382, %s384
      %p391 = scmp.eq.s32.totalorder %s54, 1
      %p392 = por %p390, %p391
      %p393 = scmp.ne.s32.totalorder %s384, %s385
      %p394 = scmp.eq.s32.totalorder %s54, 0
      %p395 = por %p393, %p394
      %p396 = scmp.ne.s32.totalorder %s384, %s385
      %p397 = scmp.eq.s32.totalorder %s55, 1
      %p398 = por %p396, %p397
      %p400 = scmp.ne.s32.totalorder %s385, %s399
      %p401 = scmp.eq.s32.totalorder %s55, 0
      %p402 = por %p400, %p401
      %s404 = sadd.s32 %s403, 1
      %p407 = scmp.eq.s32.totalorder %s49, 1
      %p408 = scmp.ne.s32.totalorder %s403, %s405
      %p409 = scmp.eq.s32.totalorder %s49, 0
      %p410 = por %p408, %p409
      %p411 = scmp.ne.s32.totalorder %s403, %s405
      %p412 = scmp.eq.s32.totalorder %s54, 1
      %p413 = por %p411, %p412
      %p414 = scmp.ne.s32.totalorder %s405, %s406
      %p415 = scmp.eq.s32.totalorder %s54, 0
      %p416 = por %p414, %p415
      %p417 = scmp.ne.s32.totalorder %s405, %s406
      %p418 = scmp.eq.s32.totalorder %s55, 1
      %p419 = por %p417, %p418
      %p421 = scmp.ne.s32.totalorder %s406, %s420
      %p422 = scmp.eq.s32.totalorder %s55, 0
      %p423 = por %p421, %p422
      %s425 = sadd.s32 %s424, 1
      %p428 = scmp.eq.s32.totalorder %s49, 1
      %p429 = scmp.ne.s32.totalorder %s424, %s426
      %p430 = scmp.eq.s32.totalorder %s49, 0
      %p431 = por %p429, %p430
      %p432 = scmp.ne.s32.totalorder %s424, %s426
      %p433 = scmp.eq.s32.totalorder %s54, 1
      %p434 = por %p432, %p433
      %p435 = scmp.ne.s32.totalorder %s426, %s427
      %p436 = scmp.eq.s32.totalorder %s54, 0
      %p437 = por %p435, %p436
      %p438 = scmp.ne.s32.totalorder %s426, %s427
      %p439 = scmp.eq.s32.totalorder %s55, 1
      %p440 = por %p438, %p439
      %p442 = scmp.ne.s32.totalorder %s427, %s441
      %p443 = scmp.eq.s32.totalorder %s55, 0
      %p444 = por %p442, %p443
      %s446 = sadd.s32 %s445, 1
      %p449 = scmp.eq.s32.totalorder %s49, 1
      %p450 = scmp.ne.s32.totalorder %s445, %s447
      %p451 = scmp.eq.s32.totalorder %s49, 0
      %p452 = por %p450, %p451
      %p453 = scmp.ne.s32.totalorder %s445, %s447
      %p454 = scmp.eq.s32.totalorder %s54, 1
      %p455 = por %p453, %p454
      %p456 = scmp.ne.s32.totalorder %s447, %s448
      %p457 = scmp.eq.s32.totalorder %s54, 0
      %p458 = por %p456, %p457
      %p459 = scmp.ne.s32.totalorder %s447, %s448
      %p460 = scmp.eq.s32.totalorder %s55, 1
      %p461 = por %p459, %p460
      %p463 = scmp.ne.s32.totalorder %s448, %s462
      %p464 = scmp.eq.s32.totalorder %s55, 0
      %p465 = por %p463, %p464
      %s467 = sadd.s32 %s466, 1
      %p470 = scmp.eq.s32.totalorder %s49, 1
      %p471 = scmp.ne.s32.totalorder %s466, %s468
      %p472 = scmp.eq.s32.totalorder %s49, 0
      %p473 = por %p471, %p472
      %p474 = scmp.ne.s32.totalorder %s466, %s468
      %p475 = scmp.eq.s32.totalorder %s54, 1
      %p476 = por %p474, %p475
      %p477 = scmp.ne.s32.totalorder %s468, %s469
      %p478 = scmp.eq.s32.totalorder %s54, 0
      %p479 = por %p477, %p478
      %p480 = scmp.ne.s32.totalorder %s468, %s469
      %p481 = scmp.eq.s32.totalorder %s55, 1
      %p482 = por %p480, %p481
      %p484 = scmp.ne.s32.totalorder %s469, %s483
      %p485 = scmp.eq.s32.totalorder %s55, 0
      %p486 = por %p484, %p485
      %s488 = sadd.s32 %s487, 1
      %p491 = scmp.eq.s32.totalorder %s49, 1
      %p492 = scmp.ne.s32.totalorder %s487, %s489
      %p493 = scmp.eq.s32.totalorder %s49, 0
      %p494 = por %p492, %p493
      %p495 = scmp.ne.s32.totalorder %s487, %s489
      %p496 = scmp.eq.s32.totalorder %s54, 1
      %p497 = por %p495, %p496
      %p498 = scmp.ne.s32.totalorder %s489, %s490
      %p499 = scmp.eq.s32.totalorder %s54, 0
      %p500 = por %p498, %p499
      %p501 = scmp.ne.s32.totalorder %s489, %s490
      %p502 = scmp.eq.s32.totalorder %s55, 1
      %p503 = por %p501, %p502
      %p505 = scmp.ne.s32.totalorder %s490, %s504
      %p506 = scmp.eq.s32.totalorder %s55, 0
      %p507 = por %p505, %p506
      %s509 = sadd.s32 %s508, 1
      %p512 = scmp.eq.s32.totalorder %s49, 1
      %p513 = scmp.ne.s32.totalorder %s508, %s510
      %p514 = scmp.eq.s32.totalorder %s49, 0
      %p515 = por %p513, %p514
      %p516 = scmp.ne.s32.totalorder %s508, %s510
      %p517 = scmp.eq.s32.totalorder %s54, 1
      %p518 = por %p516, %p517
      %p519 = scmp.ne.s32.totalorder %s510, %s511
      %p520 = scmp.eq.s32.totalorder %s54, 0
      %p521 = por %p519, %p520
      %p522 = scmp.ne.s32.totalorder %s510, %s511
      %p523 = scmp.eq.s32.totalorder %s55, 1
      %p524 = por %p522, %p523
      %p526 = scmp.ne.s32.totalorder %s511, %s525
      %p527 = scmp.eq.s32.totalorder %s55, 0
      %p528 = por %p526, %p527
      %s529 = ssub.s32 %s49, %s56
      %p530 = scmp.eq.s32.totalorder %s529, 0
      %s532 = sadd.s32 %s531, 1
      %s533 = scalar_select %p530, %s531, %s532
      %p536 = pneg %p530
      %p537 = scmp.eq.s32.totalorder %s49, 1
      %p538 = por %p536, %p537
      %p539 = scmp.ne.s32.totalorder %s531, %s534
      %p540 = scmp.eq.s32.totalorder %s49, 0
      %p541 = por %p539, %p540
      %p542 = scmp.ne.s32.totalorder %s531, %s534
      %p543 = scmp.eq.s32.totalorder %s54, 1
      %p544 = por %p542, %p543
      %p545 = scmp.ne.s32.totalorder %s534, %s535
      %p546 = scmp.eq.s32.totalorder %s54, 0
      %p547 = por %p545, %p546
      %p548 = scmp.ne.s32.totalorder %s534, %s535
      %p549 = scmp.eq.s32.totalorder %s55, 1
      %p550 = por %p548, %p549
      %p552 = scmp.ne.s32.totalorder %s535, %s551
      %p553 = scmp.eq.s32.totalorder %s55, 0
      %p554 = por %p552, %p553
      %s555 = ssub.s32 %s49, %s56
      %p556 = scmp.eq.s32.totalorder %s555, 0
      %s558 = sadd.s32 %s557, 1
      %s559 = scalar_select %p556, %s557, %s558
      %p562 = pneg %p556
      %p563 = scmp.eq.s32.totalorder %s49, 1
      %p564 = por %p562, %p563
      %p565 = scmp.ne.s32.totalorder %s557, %s560
      %p566 = scmp.eq.s32.totalorder %s49, 0
      %p567 = por %p565, %p566
      %p568 = scmp.ne.s32.totalorder %s557, %s560
      %p569 = scmp.eq.s32.totalorder %s54, 1
      %p570 = por %p568, %p569
      %p571 = scmp.ne.s32.totalorder %s560, %s561
      %p572 = scmp.eq.s32.totalorder %s54, 0
      %p573 = por %p571, %p572
      %p574 = scmp.ne.s32.totalorder %s560, %s561
      %p575 = scmp.eq.s32.totalorder %s55, 1
      %p576 = por %p574, %p575
      %p578 = scmp.ne.s32.totalorder %s561, %s577
      %p579 = scmp.eq.s32.totalorder %s55, 0
      %p580 = por %p578, %p579
      %p581 = scmp.le.s32.totalorder 1, %s49
      %p582 = scmp.lt.s32.totalorder %s49, 3
      %p583 = pnand %p581, %p582
      %p584 = pneg %p583
      // Predicated region
      $region9: #{tpu_custom_call.1} parent=5 // pred_check
        _
      $region10: #{tpu_custom_call.1} parent=5 // pred_check_branch
        %586 = sbr.rel (%p583) target = $region12
      $region11: #{tpu_custom_call.1} parent=5 // pred_region
        %s587 = ssub.s32 %s49, 1
        // Predicated region
        $region13: #{tpu_custom_call.1} parent=11 // pred_check
          %p588 = pneg %p122
        $region14: #{tpu_custom_call.1} parent=11 // pred_check_branch
          %590 = sbr.rel (%p588) target = $region16
        $region15: #{tpu_custom_call.1} parent=11 // pred_region
          %s592 = ssub.s32 4096, 4096
          %593 = vsyncadd [#allocation6], %s592
          %s594 = sshll.u32 [#allocation7], 4
          %s595 = int_to_ptr.vmem [resolvable:$true] %s594
          %600 = dma.hbm_to_vmem [thread:$0]  %s2, 4096, %s595, [#allocation6], 128, 128, 8
        $region16: #{tpu_custom_call.1} parent=11 // pred_fallthru
          _
        // Predicated region
        $region17: #{tpu_custom_call.1} parent=11 // pred_check
          %p601 = pneg %p143
        $region18: #{tpu_custom_call.1} parent=11 // pred_check_branch
          %603 = sbr.rel (%p601) target = $region20
        $region19: #{tpu_custom_call.1} parent=11 // pred_region
          _
        $region20: #{tpu_custom_call.1} parent=11 // pred_fallthru
          _
        // Predicated region
        $region21: #{tpu_custom_call.1} parent=11 // pred_check
          %p604 = pneg %p164
        $region22: #{tpu_custom_call.1} parent=11 // pred_check_branch
          %606 = sbr.rel (%p604) target = $region24
        $region23: #{tpu_custom_call.1} parent=11 // pred_region
          %s608 = ssub.s32 16, 16
          %609 = vsyncadd [#allocation9], %s608
          %s611 = sshll.u32 [#allocation8], 4
          %s612 = int_to_ptr.vmem [resolvable:$true] %s611
          %614 = dma.hbm_to_vmem [thread:$0]  %s4, 16, %s612, [#allocation9]
        $region24: #{tpu_custom_call.1} parent=11 // pred_fallthru
          _
        // Predicated region
        $region25: #{tpu_custom_call.1} parent=11 // pred_check
          %p615 = pneg %p185
        $region26: #{tpu_custom_call.1} parent=11 // pred_check_branch
          %617 = sbr.rel (%p615) target = $region28
        $region27: #{tpu_custom_call.1} parent=11 // pred_region
          %s619 = ssub.s32 16, 16
          %620 = vsyncadd [#allocation9], %s619
          %s622 = sshll.u32 [#allocation10], 4
          %s623 = int_to_ptr.vmem [resolvable:$true] %s622
          %625 = dma.hbm_to_vmem [thread:$0]  %s5, 16, %s623, [#allocation9]
        $region28: #{tpu_custom_call.1} parent=11 // pred_fallthru
          _
        // Predicated region
        $region29: #{tpu_custom_call.1} parent=11 // pred_check
          %p626 = pneg %p206
        $region30: #{tpu_custom_call.1} parent=11 // pred_check_branch
          %628 = sbr.rel (%p626) target = $region32
        $region31: #{tpu_custom_call.1} parent=11 // pred_region
          %s630 = ssub.s32 16, 16
          %631 = vsyncadd [#allocation12], %s630
          %s633 = sshll.u32 [#allocation11], 4
          %s634 = int_to_ptr.vmem [resolvable:$true] %s633
          %636 = dma.hbm_to_vmem [thread:$0]  %s6, 16, %s634, [#allocation12]
        $region32: #{tpu_custom_call.1} parent=11 // pred_fallthru
          _
        // Predicated region
        $region33: #{tpu_custom_call.1} parent=11 // pred_check
          %p637 = pneg %p227
        $region34: #{tpu_custom_call.1} parent=11 // pred_check_branch
          %639 = sbr.rel (%p637) target = $region36
        $region35: #{tpu_custom_call.1} parent=11 // pred_region
          %s641 = ssub.s32 16, 16
          %642 = vsyncadd [#allocation12], %s641
          %s644 = sshll.u32 [#allocation13], 4
          %s645 = int_to_ptr.vmem [resolvable:$true] %s644
          %647 = dma.hbm_to_vmem [thread:$0]  %s7, 16, %s645, [#allocation12]
        $region36: #{tpu_custom_call.1} parent=11 // pred_fallthru
          _
        // Predicated region
        $region37: #{tpu_custom_call.1} parent=11 // pred_check
          %p648 = pneg %p248
        $region38: #{tpu_custom_call.1} parent=11 // pred_check_branch
          %650 = sbr.rel (%p648) target = $region40
        $region39: #{tpu_custom_call.1} parent=11 // pred_region
          %s652 = ssub.s32 1024, 1024
          %653 = vsyncadd [#allocation15], %s652
          %s654 = sshll.u32 [#allocation14], 4
          %s655 = int_to_ptr.vmem [resolvable:$true] %s654
          %660 = dma.hbm_to_vmem [thread:$0]  %s8, 1024, %s655, [#allocation15], 64, 64, 4
        $region40: #{tpu_custom_call.1} parent=11 // pred_fallthru
          _
        // Predicated region
        $region41: #{tpu_custom_call.1} parent=11 // pred_check
          %p661 = pneg %p269
        $region42: #{tpu_custom_call.1} parent=11 // pred_check_branch
          %663 = sbr.rel (%p661) target = $region44
        $region43: #{tpu_custom_call.1} parent=11 // pred_region
          %s665 = ssub.s32 16, 16
          %666 = vsyncadd [#allocation15], %s665
          %s668 = sshll.u32 [#allocation16], 4
          %s669 = int_to_ptr.vmem [resolvable:$true] %s668
          %671 = dma.hbm_to_vmem [thread:$0]  %s9, 16, %s669, [#allocation15]
        $region44: #{tpu_custom_call.1} parent=11 // pred_fallthru
          _
        // Predicated region
        $region45: #{tpu_custom_call.1} parent=11 // pred_check
          %p672 = pneg %p290
        $region46: #{tpu_custom_call.1} parent=11 // pred_check_branch
          %674 = sbr.rel (%p672) target = $region48
        $region47: #{tpu_custom_call.1} parent=11 // pred_region
          %s676 = ssub.s32 2048, 2048
          %677 = vsyncadd [#allocation18], %s676
          %s678 = sshll.u32 [#allocation17], 4
          %s679 = int_to_ptr.vmem [resolvable:$true] %s678
          %684 = dma.hbm_to_vmem [thread:$0]  %s10, 2048, %s679, [#allocation18], 128, 128, 8
        $region48: #{tpu_custom_call.1} parent=11 // pred_fallthru
          _
        // Predicated region
        $region49: #{tpu_custom_call.1} parent=11 // pred_check
          %p685 = pneg %p311
        $region50: #{tpu_custom_call.1} parent=11 // pred_check_branch
          %687 = sbr.rel (%p685) target = $region52
        $region51: #{tpu_custom_call.1} parent=11 // pred_region
          _
        $region52: #{tpu_custom_call.1} parent=11 // pred_fallthru
          _
        // Predicated region
        $region53: #{tpu_custom_call.1} parent=11 // pred_check
          %p688 = pneg %p332
        $region54: #{tpu_custom_call.1} parent=11 // pred_check_branch
          %690 = sbr.rel (%p688) target = $region56
        $region55: #{tpu_custom_call.1} parent=11 // pred_region
          %s692 = ssub.s32 16, 16
          %693 = vsyncadd [#allocation18], %s692
          %s695 = sshll.u32 [#allocation19], 4
          %s696 = int_to_ptr.vmem [resolvable:$true] %s695
          %698 = dma.hbm_to_vmem [thread:$0]  %s12, 16, %s696, [#allocation18]
        $region56: #{tpu_custom_call.1} parent=11 // pred_fallthru
          _
        // Predicated region
        $region57: #{tpu_custom_call.1} parent=11 // pred_check
          %p699 = pneg %p353
        $region58: #{tpu_custom_call.1} parent=11 // pred_check_branch
          %701 = sbr.rel (%p699) target = $region60
        $region59: #{tpu_custom_call.1} parent=11 // pred_region
          %s703 = ssub.s32 16, 16
          %704 = vsyncadd [#allocation21], %s703
          %s706 = sshll.u32 [#allocation20], 4
          %s707 = int_to_ptr.vmem [resolvable:$true] %s706
          %709 = dma.hbm_to_vmem [thread:$0]  %s13, 16, %s707, [#allocation21]
        $region60: #{tpu_custom_call.1} parent=11 // pred_fallthru
          _
        // Predicated region
        $region61: #{tpu_custom_call.1} parent=11 // pred_check
          %p710 = pneg %p374
        $region62: #{tpu_custom_call.1} parent=11 // pred_check_branch
          %712 = sbr.rel (%p710) target = $region64
        $region63: #{tpu_custom_call.1} parent=11 // pred_region
          %s714 = ssub.s32 16, 16
          %715 = vsyncadd [#allocation21], %s714
          %s717 = sshll.u32 [#allocation22], 4
          %s718 = int_to_ptr.vmem [resolvable:$true] %s717
          %720 = dma.hbm_to_vmem [thread:$0]  %s14, 16, %s718, [#allocation21]
        $region64: #{tpu_custom_call.1} parent=11 // pred_fallthru
          _
        // Predicated region
        $region65: #{tpu_custom_call.1} parent=11 // pred_check
          %p721 = pneg %p395
        $region66: #{tpu_custom_call.1} parent=11 // pred_check_branch
          %723 = sbr.rel (%p721) target = $region68
        $region67: #{tpu_custom_call.1} parent=11 // pred_region
          %s725 = ssub.s32 16, 16
          %726 = vsyncadd [#allocation24], %s725
          %s728 = sshll.u32 [#allocation23], 4
          %s729 = int_to_ptr.vmem [resolvable:$true] %s728
          %731 = dma.hbm_to_vmem [thread:$0]  %s15, 16, %s729, [#allocation24]
        $region68: #{tpu_custom_call.1} parent=11 // pred_fallthru
          _
        // Predicated region
        $region69: #{tpu_custom_call.1} parent=11 // pred_check
          %p732 = pneg %p416
        $region70: #{tpu_custom_call.1} parent=11 // pred_check_branch
          %734 = sbr.rel (%p732) target = $region72
        $region71: #{tpu_custom_call.1} parent=11 // pred_region
          %s736 = ssub.s32 1024, 1024
          %737 = vsyncadd [#allocation24], %s736
          %s738 = sshll.u32 [#allocation25], 4
          %s739 = int_to_ptr.vmem [resolvable:$true] %s738
          %744 = dma.hbm_to_vmem [thread:$0]  %s16, 1024, %s739, [#allocation24], 64, 64, 4
        $region72: #{tpu_custom_call.1} parent=11 // pred_fallthru
          _
        // Predicated region
        $region73: #{tpu_custom_call.1} parent=11 // pred_check
          %p745 = pneg %p437
        $region74: #{tpu_custom_call.1} parent=11 // pred_check_branch
          %747 = sbr.rel (%p745) target = $region76
        $region75: #{tpu_custom_call.1} parent=11 // pred_region
          %s749 = ssub.s32 16, 16
          %750 = vsyncadd [#allocation27], %s749
          %s752 = sshll.u32 [#allocation26], 4
          %s753 = int_to_ptr.vmem [resolvable:$true] %s752
          %755 = dma.hbm_to_vmem [thread:$0]  %s17, 16, %s753, [#allocation27]
        $region76: #{tpu_custom_call.1} parent=11 // pred_fallthru
          _
        // Predicated region
        $region77: #{tpu_custom_call.1} parent=11 // pred_check
          %p756 = pneg %p458
        $region78: #{tpu_custom_call.1} parent=11 // pred_check_branch
          %758 = sbr.rel (%p756) target = $region80
        $region79: #{tpu_custom_call.1} parent=11 // pred_region
          _
        $region80: #{tpu_custom_call.1} parent=11 // pred_fallthru
          _
        // Predicated region
        $region81: #{tpu_custom_call.1} parent=11 // pred_check
          %p759 = pneg %p479
        $region82: #{tpu_custom_call.1} parent=11 // pred_check_branch
          %761 = sbr.rel (%p759) target = $region84
        $region83: #{tpu_custom_call.1} parent=11 // pred_region
          _
        $region84: #{tpu_custom_call.1} parent=11 // pred_fallthru
          _
        // Predicated region
        $region85: #{tpu_custom_call.1} parent=11 // pred_check
          %p762 = pneg %p500
        $region86: #{tpu_custom_call.1} parent=11 // pred_check_branch
          %764 = sbr.rel (%p762) target = $region88
        $region87: #{tpu_custom_call.1} parent=11 // pred_region
          _
        $region88: #{tpu_custom_call.1} parent=11 // pred_fallthru
          _
        // Predicated region
        $region89: #{tpu_custom_call.1} parent=11 // pred_check
          %p765 = pneg %p521
        $region90: #{tpu_custom_call.1} parent=11 // pred_check_branch
          %767 = sbr.rel (%p765) target = $region92
        $region91: #{tpu_custom_call.1} parent=11 // pred_region
          _
        $region92: #{tpu_custom_call.1} parent=11 // pred_fallthru
          _
      $region12: #{tpu_custom_call.1} parent=5 // pred_fallthru
        _
      %p768 = scmp.lt.s32.totalorder %s49, 2
      // Predicated region
      $region93: #{tpu_custom_call.1} parent=5 // pred_check
        %p769 = pneg %p768
      $region94: #{tpu_custom_call.1} parent=5 // pred_check_branch
        %771 = sbr.rel (%p769) target = $region96
      $region95: #{tpu_custom_call.1} parent=5 // pred_region
        // Predicated region
        $region97: #{tpu_custom_call.1} parent=95 // pred_check
          %p772 = pneg %p69
        $region98: #{tpu_custom_call.1} parent=95 // pred_check_branch
          %774 = sbr.rel (%p772) target = $region100
        $region99: #{tpu_custom_call.1} parent=95 // pred_region
          %s775 = sand.u32 %s59, 1
          %s776 = scalar_lea.sflag [#allocation3], %s775
          %s777 = sand.u32 %s59, 1
          %s778 = smul.addr %s777, 32
          %s779 = scalar_lea.vmem [#allocation2], %s778
          %s780 = smul.u32 4, %s49
          %s782 = ssub.s32 512, 512
          %783 = vsyncadd %s776, %s782
          %s784 = smul.addr %s780, 2
          %s785 = smul.addr %s784, 64
          %s786 = scalar_lea.hbm %s0, %s785
          %s787 = sshll.u32 %s779, 4
          %s788 = int_to_ptr.vmem [resolvable:$true] %s787
          %793 = dma.hbm_to_vmem [thread:$0]  %s786, 512, %s788, %s776, 128, 128, 8
        $region100: #{tpu_custom_call.1} parent=95 // pred_fallthru
          _
        // Predicated region
        $region101: #{tpu_custom_call.1} parent=95 // pred_check
          %p794 = pneg %p95
        $region102: #{tpu_custom_call.1} parent=95 // pred_check_branch
          %796 = sbr.rel (%p794) target = $region104
        $region103: #{tpu_custom_call.1} parent=95 // pred_region
          %s797 = sand.u32 %s49, 1
          %s798 = scalar_lea.sflag [#allocation6], %s797
          %s799 = sand.u32 %s85, 1
          %s800 = smul.addr %s799, 16
          %s801 = scalar_lea.vmem [#allocation5], %s800
          %s802 = smul.u32 4, %s49
          %s804 = ssub.s32 256, 256
          %805 = vsyncadd %s798, %s804
          %s806 = smul.addr %s802, 64
          %s807 = scalar_lea.hbm %s1, %s806
          %s808 = sshll.u32 %s801, 4
          %s809 = int_to_ptr.vmem [resolvable:$true] %s808
          %814 = dma.hbm_to_vmem [thread:$0]  %s807, 256, %s809, %s798, 64, 64, 4
        $region104: #{tpu_custom_call.1} parent=95 // pred_fallthru
          _
      $region96: #{tpu_custom_call.1} parent=5 // pred_fallthru
        _
      %p815 = scmp.le.s32.totalorder 1, %s49
      %p816 = scmp.lt.s32.totalorder %s49, 3
      %p817 = pnand %p815, %p816
      %p818 = pneg %p817
      // Predicated region
      $region105: #{tpu_custom_call.1} parent=5 // pred_check
        _
      $region106: #{tpu_custom_call.1} parent=5 // pred_check_branch
        %820 = sbr.rel (%p817) target = $region108
      $region107: #{tpu_custom_call.1} parent=5 // pred_region
        %s821 = ssub.s32 %s49, 1
        %s822 = sand.u32 %s62, 1
        %s823 = scalar_lea.sflag [#allocation3], %s822
        %s824 = sand.u32 %s62, 1
        %s825 = smul.addr %s824, 32
        %s826 = scalar_lea.vmem [#allocation2], %s825
        // Predicated region
        $region109: #{tpu_custom_call.1} parent=107 // pred_check
          %p827 = pneg %p75
        $region110: #{tpu_custom_call.1} parent=107 // pred_check_branch
          %829 = sbr.rel (%p827) target = $region112
        $region111: #{tpu_custom_call.1} parent=107 // pred_region
          %830 = dma.done %s823, 512
        $region112: #{tpu_custom_call.1} parent=107 // pred_fallthru
          _
        %s831 = sand.u32 %s54, 1
        %s832 = scalar_lea.sflag [#allocation6], %s831
        %s833 = sand.u32 %s88, 1
        %s834 = smul.addr %s833, 16
        %s835 = scalar_lea.vmem [#allocation5], %s834
        // Predicated region
        $region113: #{tpu_custom_call.1} parent=107 // pred_check
          %p836 = pneg %p101
        $region114: #{tpu_custom_call.1} parent=107 // pred_check_branch
          %838 = sbr.rel (%p836) target = $region116
        $region115: #{tpu_custom_call.1} parent=107 // pred_region
          %839 = dma.done %s832, 256
        $region116: #{tpu_custom_call.1} parent=107 // pred_fallthru
          _
        // Predicated region
        $region117: #{tpu_custom_call.1} parent=107 // pred_check
          %p840 = pneg %p122
        $region118: #{tpu_custom_call.1} parent=107 // pred_check_branch
          %842 = sbr.rel (%p840) target = $region120
        $region119: #{tpu_custom_call.1} parent=107 // pred_region
          %843 = dma.done [#allocation6], 4096
        $region120: #{tpu_custom_call.1} parent=107 // pred_fallthru
          _
        // Predicated region
        $region121: #{tpu_custom_call.1} parent=107 // pred_check
          %p844 = pneg %p164
        $region122: #{tpu_custom_call.1} parent=107 // pred_check_branch
          %846 = sbr.rel (%p844) target = $region124
        $region123: #{tpu_custom_call.1} parent=107 // pred_region
          %847 = dma.done [#allocation9], 16
        $region124: #{tpu_custom_call.1} parent=107 // pred_fallthru
          _
        // Predicated region
        $region125: #{tpu_custom_call.1} parent=107 // pred_check
          %p848 = pneg %p185
        $region126: #{tpu_custom_call.1} parent=107 // pred_check_branch
          %850 = sbr.rel (%p848) target = $region128
        $region127: #{tpu_custom_call.1} parent=107 // pred_region
          %851 = dma.done [#allocation9], 16
        $region128: #{tpu_custom_call.1} parent=107 // pred_fallthru
          _
        // Predicated region
        $region129: #{tpu_custom_call.1} parent=107 // pred_check
          %p852 = pneg %p206
        $region130: #{tpu_custom_call.1} parent=107 // pred_check_branch
          %854 = sbr.rel (%p852) target = $region132
        $region131: #{tpu_custom_call.1} parent=107 // pred_region
          %855 = dma.done [#allocation12], 16
        $region132: #{tpu_custom_call.1} parent=107 // pred_fallthru
          _
        // Predicated region
        $region133: #{tpu_custom_call.1} parent=107 // pred_check
          %p856 = pneg %p227
        $region134: #{tpu_custom_call.1} parent=107 // pred_check_branch
          %858 = sbr.rel (%p856) target = $region136
        $region135: #{tpu_custom_call.1} parent=107 // pred_region
          %859 = dma.done [#allocation12], 16
        $region136: #{tpu_custom_call.1} parent=107 // pred_fallthru
          _
        // Predicated region
        $region137: #{tpu_custom_call.1} parent=107 // pred_check
          %p860 = pneg %p248
        $region138: #{tpu_custom_call.1} parent=107 // pred_check_branch
          %862 = sbr.rel (%p860) target = $region140
        $region139: #{tpu_custom_call.1} parent=107 // pred_region
          %863 = dma.done [#allocation15], 1024
        $region140: #{tpu_custom_call.1} parent=107 // pred_fallthru
          _
        // Predicated region
        $region141: #{tpu_custom_call.1} parent=107 // pred_check
          %p864 = pneg %p269
        $region142: #{tpu_custom_call.1} parent=107 // pred_check_branch
          %866 = sbr.rel (%p864) target = $region144
        $region143: #{tpu_custom_call.1} parent=107 // pred_region
          %867 = dma.done [#allocation15], 16
        $region144: #{tpu_custom_call.1} parent=107 // pred_fallthru
          _
        // Predicated region
        $region145: #{tpu_custom_call.1} parent=107 // pred_check
          %p868 = pneg %p290
        $region146: #{tpu_custom_call.1} parent=107 // pred_check_branch
          %870 = sbr.rel (%p868) target = $region148
        $region147: #{tpu_custom_call.1} parent=107 // pred_region
          %871 = dma.done [#allocation18], 2048
        $region148: #{tpu_custom_call.1} parent=107 // pred_fallthru
          _
        // Predicated region
        $region149: #{tpu_custom_call.1} parent=107 // pred_check
          %p872 = pneg %p332
        $region150: #{tpu_custom_call.1} parent=107 // pred_check_branch
          %874 = sbr.rel (%p872) target = $region152
        $region151: #{tpu_custom_call.1} parent=107 // pred_region
          %875 = dma.done [#allocation18], 16
        $region152: #{tpu_custom_call.1} parent=107 // pred_fallthru
          _
        // Predicated region
        $region153: #{tpu_custom_call.1} parent=107 // pred_check
          %p876 = pneg %p353
        $region154: #{tpu_custom_call.1} parent=107 // pred_check_branch
          %878 = sbr.rel (%p876) target = $region156
        $region155: #{tpu_custom_call.1} parent=107 // pred_region
          %879 = dma.done [#allocation21], 16
        $region156: #{tpu_custom_call.1} parent=107 // pred_fallthru
          _
        // Predicated region
        $region157: #{tpu_custom_call.1} parent=107 // pred_check
          %p880 = pneg %p374
        $region158: #{tpu_custom_call.1} parent=107 // pred_check_branch
          %882 = sbr.rel (%p880) target = $region160
        $region159: #{tpu_custom_call.1} parent=107 // pred_region
          %883 = dma.done [#allocation21], 16
        $region160: #{tpu_custom_call.1} parent=107 // pred_fallthru
          _
        // Predicated region
        $region161: #{tpu_custom_call.1} parent=107 // pred_check
          %p884 = pneg %p395
        $region162: #{tpu_custom_call.1} parent=107 // pred_check_branch
          %886 = sbr.rel (%p884) target = $region164
        $region163: #{tpu_custom_call.1} parent=107 // pred_region
          %887 = dma.done [#allocation24], 16
        $region164: #{tpu_custom_call.1} parent=107 // pred_fallthru
          _
        // Predicated region
        $region165: #{tpu_custom_call.1} parent=107 // pred_check
          %p888 = pneg %p416
        $region166: #{tpu_custom_call.1} parent=107 // pred_check_branch
          %890 = sbr.rel (%p888) target = $region168
        $region167: #{tpu_custom_call.1} parent=107 // pred_region
          %891 = dma.done [#allocation24], 1024
        $region168: #{tpu_custom_call.1} parent=107 // pred_fallthru
          _
        // Predicated region
        $region169: #{tpu_custom_call.1} parent=107 // pred_check
          %p892 = pneg %p437
        $region170: #{tpu_custom_call.1} parent=107 // pred_check_branch
          %894 = sbr.rel (%p892) target = $region172
        $region171: #{tpu_custom_call.1} parent=107 // pred_region
          %895 = dma.done [#allocation27], 16
        $region172: #{tpu_custom_call.1} parent=107 // pred_fallthru
          _
        %s896 = sand.u32 %s62, 1
        %s897 = scalar_lea.sflag [#allocation3], %s896
        %s898 = sand.u32 %s62, 1
        %s899 = smul.addr %s898, 32
        %s900 = scalar_lea.vmem [#allocation2], %s899
        %p901 = pneg %p75
        %p902 = pneg %p72
        %s903 = sand.u32 %s54, 1
        %s904 = scalar_lea.sflag [#allocation6], %s903
        %s905 = sand.u32 %s88, 1
        %s906 = smul.addr %s905, 16
        %s907 = scalar_lea.vmem [#allocation5], %s906
        %p908 = pneg %p101
        %p909 = pneg %p98
        %p910 = pneg %p122
        %p911 = pneg %p119
        %p912 = pneg %p143
        %p913 = pneg %p140
        %p914 = pneg %p164
        %p915 = pneg %p161
        %p916 = pneg %p185
        %p917 = pneg %p182
        %p918 = pneg %p206
        %p919 = pneg %p203
        %p920 = pneg %p227
        %p921 = pneg %p224
        %p922 = pneg %p248
        %p923 = pneg %p245
        %p924 = pneg %p269
        %p925 = pneg %p266
        %p926 = pneg %p290
        %p927 = pneg %p287
        %p928 = pneg %p311
        %p929 = pneg %p308
        %p930 = pneg %p332
        %p931 = pneg %p329
        %p932 = pneg %p353
        %p933 = pneg %p350
        %p934 = pneg %p374
        %p935 = pneg %p371
        %p936 = pneg %p395
        %p937 = pneg %p392
        %p938 = pneg %p416
        %p939 = pneg %p413
        %p940 = pneg %p437
        %p941 = pneg %p434
        %p942 = pneg %p458
        %p943 = pneg %p455
        %p944 = pneg %p479
        %p945 = pneg %p476
        %p946 = pneg %p500
        %p947 = pneg %p497
        %p948 = pneg %p521
        %p949 = pneg %p518
        %p950 = pneg %p547
        %p951 = pneg %p544
        %s952 = sand.u32 %s534, 1
        %s953 = scalar_lea.sflag [#allocation4], %s952
        %s954 = sand.u32 %s534, 1
        %s955 = smul.addr %s954, 32
        %s956 = scalar_lea.vmem [#allocation28], %s955
        %p957 = pneg %p573
        %p958 = pneg %p570
        %s959 = sand.u32 %s560, 1
        %s960 = scalar_lea.sflag [#allocation30], %s959
        %s961 = sand.u32 %s560, 1
        %s962 = smul.addr %s961, 64
        %s963 = scalar_lea.vmem [#allocation29], %s962
        %s964 = smul.u32 4, %s54
        %s965 = smul.u32 4, %s54
        %s966 = smul.u32 4, %s54
        %s967 = smul.u32 4, %s54
        %v969 = vld [vmem:[%s826] sm:$0xff]
        %v970 = vld [vmem:[%s826 + $0x8] sm:$0xff]
        %v971 = vld [vmem:[%s826 + $0x10] sm:$0xff]
        %v972 = vld [vmem:[%s826 + $0x18] sm:$0xff]
        %v973 = vld [vmem:[#allocation7] sm:$0xff]
        %v974 = vld [vmem:[#allocation7 + $0x8] sm:$0xff]
        %v975 = vld [vmem:[#allocation7 + $0x10] sm:$0xff]
        %v976 = vld [vmem:[#allocation7 + $0x18] sm:$0xff]
        %v977 = vld [vmem:[#allocation7 + $0x20] sm:$0xff]
        %v978 = vld [vmem:[#allocation7 + $0x28] sm:$0xff]
        %v979 = vld [vmem:[#allocation7 + $0x30] sm:$0xff]
        %v980 = vld [vmem:[#allocation7 + $0x38] sm:$0xff]
        %v981 = vld [vmem:[#allocation7 + $0x40] sm:$0xff]
        %v982 = vld [vmem:[#allocation7 + $0x48] sm:$0xff]
        %v983 = vld [vmem:[#allocation7 + $0x50] sm:$0xff]
        %v984 = vld [vmem:[#allocation7 + $0x58] sm:$0xff]
        %v985 = vld [vmem:[#allocation7 + $0x60] sm:$0xff]
        %v986 = vld [vmem:[#allocation7 + $0x68] sm:$0xff]
        %v987 = vld [vmem:[#allocation7 + $0x70] sm:$0xff]
        %v988 = vld [vmem:[#allocation7 + $0x78] sm:$0xff]
        %v989 = vld [vmem:[#allocation7 + $0x80] sm:$0xff]
        %v990 = vld [vmem:[#allocation7 + $0x88] sm:$0xff]
        %v991 = vld [vmem:[#allocation7 + $0x90] sm:$0xff]
        %v992 = vld [vmem:[#allocation7 + $0x98] sm:$0xff]
        %v993 = vld [vmem:[#allocation7 + $0xa0] sm:$0xff]
        %v994 = vld [vmem:[#allocation7 + $0xa8] sm:$0xff]
        %v995 = vld [vmem:[#allocation7 + $0xb0] sm:$0xff]
        %v996 = vld [vmem:[#allocation7 + $0xb8] sm:$0xff]
        %v997 = vld [vmem:[#allocation7 + $0xc0] sm:$0xff]
        %v998 = vld [vmem:[#allocation7 + $0xc8] sm:$0xff]
        %v999 = vld [vmem:[#allocation7 + $0xd0] sm:$0xff]
        %v1000 = vld [vmem:[#allocation7 + $0xd8] sm:$0xff]
        %v1001 = vld [vmem:[#allocation7 + $0xe0] sm:$0xff]
        %v1002 = vld [vmem:[#allocation7 + $0xe8] sm:$0xff]
        %v1003 = vld [vmem:[#allocation7 + $0xf0] sm:$0xff]
        %v1004 = vld [vmem:[#allocation7 + $0xf8] sm:$0xff]
        %v1005 = vld [vmem:[%s3] sm:$0x3]
        %v1007 = vlaneseq
        %v1008 = vshrl.u32 %v1007, 7
        %v1009 = vsub.s32 0, %v1008
        %v1010 = vrot.slane %v1005, %v1009
        %v1011 = vlaneseq
        %v1012 = vshrl.u32 %v1011, 7
        %v1013 = vsub.s32 1, %v1012
        %v1014 = vrot.slane %v1005, %v1013
        %v1021 = vunpack.c.l.b16 %v969
        %v1022 = vunpack.c.h.b16 %v969
        %v1023 = vunpack.c.l.b16 %v970
        %v1024 = vunpack.c.h.b16 %v970
        %v1025 = vunpack.c.l.b16 %v971
        %v1026 = vunpack.c.h.b16 %v971
        %v1027 = vunpack.c.l.b16 %v972
        %v1028 = vunpack.c.h.b16 %v972
        %v1029 = vpack.c.b16 %v1023, %v1021
        %v1030 = vpack.c.b16 %v1024, %v1022
        %v1031 = vpack.c.b16 %v1027, %v1025
        %v1032 = vpack.c.b16 %v1028, %v1026
        %v1069 = vunpack.c.l.b16 %v973
        %v1070 = vunpack.c.h.b16 %v973
        %v1071 = vunpack.c.l.b16 %v974
        %v1072 = vunpack.c.h.b16 %v974
        %v1073 = vunpack.c.l.b16 %v975
        %v1074 = vunpack.c.h.b16 %v975
        %v1075 = vunpack.c.l.b16 %v976
        %v1076 = vunpack.c.h.b16 %v976
        %v1077 = vunpack.c.l.b16 %v977
        %v1078 = vunpack.c.h.b16 %v977
        %v1079 = vunpack.c.l.b16 %v978
        %v1080 = vunpack.c.h.b16 %v978
        %v1081 = vunpack.c.l.b16 %v979
        %v1082 = vunpack.c.h.b16 %v979
        %v1083 = vunpack.c.l.b16 %v980
        %v1084 = vunpack.c.h.b16 %v980
        %v1085 = vunpack.c.l.b16 %v981
        %v1086 = vunpack.c.h.b16 %v981
        %v1087 = vunpack.c.l.b16 %v982
        %v1088 = vunpack.c.h.b16 %v982
        %v1089 = vunpack.c.l.b16 %v983
        %v1090 = vunpack.c.h.b16 %v983
        %v1091 = vunpack.c.l.b16 %v984
        %v1092 = vunpack.c.h.b16 %v984
        %v1093 = vunpack.c.l.b16 %v985
        %v1094 = vunpack.c.h.b16 %v985
        %v1095 = vunpack.c.l.b16 %v986
        %v1096 = vunpack.c.h.b16 %v986
        %v1097 = vunpack.c.l.b16 %v987
        %v1098 = vunpack.c.h.b16 %v987
        %v1099 = vunpack.c.l.b16 %v988
        %v1100 = vunpack.c.h.b16 %v988
        %v1101 = vunpack.c.l.b16 %v989
        %v1102 = vunpack.c.h.b16 %v989
        %v1103 = vunpack.c.l.b16 %v990
        %v1104 = vunpack.c.h.b16 %v990
        %v1105 = vunpack.c.l.b16 %v991
        %v1106 = vunpack.c.h.b16 %v991
        %v1107 = vunpack.c.l.b16 %v992
        %v1108 = vunpack.c.h.b16 %v992
        %v1109 = vunpack.c.l.b16 %v993
        %v1110 = vunpack.c.h.b16 %v993
        %v1111 = vunpack.c.l.b16 %v994
        %v1112 = vunpack.c.h.b16 %v994
        %v1113 = vunpack.c.l.b16 %v995
        %v1114 = vunpack.c.h.b16 %v995
        %v1115 = vunpack.c.l.b16 %v996
        %v1116 = vunpack.c.h.b16 %v996
        %v1117 = vunpack.c.l.b16 %v997
        %v1118 = vunpack.c.h.b16 %v997
        %v1119 = vunpack.c.l.b16 %v998
        %v1120 = vunpack.c.h.b16 %v998
        %v1121 = vunpack.c.l.b16 %v999
        %v1122 = vunpack.c.h.b16 %v999
        %v1123 = vunpack.c.l.b16 %v1000
        %v1124 = vunpack.c.h.b16 %v1000
        %v1125 = vunpack.c.l.b16 %v1001
        %v1126 = vunpack.c.h.b16 %v1001
        %v1127 = vunpack.c.l.b16 %v1002
        %v1128 = vunpack.c.h.b16 %v1002
        %v1129 = vunpack.c.l.b16 %v1003
        %v1130 = vunpack.c.h.b16 %v1003
        %v1131 = vunpack.c.l.b16 %v1004
        %v1132 = vunpack.c.h.b16 %v1004
        %v1133 = vpack.c.b16 %v1071, %v1069
        %v1134 = vpack.c.b16 %v1072, %v1070
        %v1135 = vpack.c.b16 %v1075, %v1073
        %v1136 = vpack.c.b16 %v1076, %v1074
        %v1137 = vpack.c.b16 %v1079, %v1077
        %v1138 = vpack.c.b16 %v1080, %v1078
        %v1139 = vpack.c.b16 %v1083, %v1081
        %v1140 = vpack.c.b16 %v1084, %v1082
        %v1141 = vpack.c.b16 %v1087, %v1085
        %v1142 = vpack.c.b16 %v1088, %v1086
        %v1143 = vpack.c.b16 %v1091, %v1089
        %v1144 = vpack.c.b16 %v1092, %v1090
        %v1145 = vpack.c.b16 %v1095, %v1093
        %v1146 = vpack.c.b16 %v1096, %v1094
        %v1147 = vpack.c.b16 %v1099, %v1097
        %v1148 = vpack.c.b16 %v1100, %v1098
        %v1149 = vpack.c.b16 %v1103, %v1101
        %v1150 = vpack.c.b16 %v1104, %v1102
        %v1151 = vpack.c.b16 %v1107, %v1105
        %v1152 = vpack.c.b16 %v1108, %v1106
        %v1153 = vpack.c.b16 %v1111, %v1109
        %v1154 = vpack.c.b16 %v1112, %v1110
        %v1155 = vpack.c.b16 %v1115, %v1113
        %v1156 = vpack.c.b16 %v1116, %v1114
        %v1157 = vpack.c.b16 %v1119, %v1117
        %v1158 = vpack.c.b16 %v1120, %v1118
        %v1159 = vpack.c.b16 %v1123, %v1121
        %v1160 = vpack.c.b16 %v1124, %v1122
        %v1161 = vpack.c.b16 %v1127, %v1125
        %v1162 = vpack.c.b16 %v1128, %v1126
        %v1163 = vpack.c.b16 %v1131, %v1129
        %v1164 = vpack.c.b16 %v1132, %v1130
        %1197 = vmatprep.subr.bf16.mxu0 %v1134
        %1198 = vmatpush1.bf16.msra.mxu0 %v1133
        %1199 = vmatprep.subr.bf16.mxu0 %v1136
        %1200 = vmatpush1.bf16.msra.mxu0 %v1135
        %1201 = vmatprep.subr.bf16.mxu0 %v1138
        %1202 = vmatpush1.bf16.msra.mxu0 %v1137
        %1203 = vmatprep.subr.bf16.mxu0 %v1140
        %1204 = vmatpush1.bf16.msra.mxu0 %v1139
        %1205 = vmatprep.subr.bf16.mxu0 %v1142
        %1206 = vmatpush1.bf16.msra.mxu0 %v1141
        %1207 = vmatprep.subr.bf16.mxu0 %v1144
        %1208 = vmatpush1.bf16.msra.mxu0 %v1143
        %1209 = vmatprep.subr.bf16.mxu0 %v1146
        %1210 = vmatpush1.bf16.msra.mxu0 %v1145
        %1211 = vmatprep.subr.bf16.mxu0 %v1148
        %1212 = vmatpush1.bf16.msra.mxu0 %v1147
        %1213 = vmatprep.subr.bf16.mxu0 %v1150
        %1214 = vmatpush1.bf16.msra.mxu0 %v1149
        %1215 = vmatprep.subr.bf16.mxu0 %v1152
        %1216 = vmatpush1.bf16.msra.mxu0 %v1151
        %1217 = vmatprep.subr.bf16.mxu0 %v1154
        %1218 = vmatpush1.bf16.msra.mxu0 %v1153
        %1219 = vmatprep.subr.bf16.mxu0 %v1156
        %1220 = vmatpush1.bf16.msra.mxu0 %v1155
        %1221 = vmatprep.subr.bf16.mxu0 %v1158
        %1222 = vmatpush1.bf16.msra.mxu0 %v1157
        %1223 = vmatprep.subr.bf16.mxu0 %v1160
        %1224 = vmatpush1.bf16.msra.mxu0 %v1159
        %1225 = vmatprep.subr.bf16.mxu0 %v1162
        %1226 = vmatpush1.bf16.msra.mxu0 %v1161
        %1227 = vmatprep.subr.bf16.mxu0 %v1164
        %1228 = vmatpush1.bf16.msra.mxu0 %v1163
        %1229 = vmatprep.mubr.bf16.mxu0 %v1030
        %1230 = vmatmul.mubr.bf16.gmra.mrb[0].mxu0 %v1029
        %v1231 = vpop.f32.mrb[0].mxu0
        %v1232 = vadd.f32 %v1010, %v1231
        %v1233 = vpop.f32.mrb[0].mxu0
        %v1234 = vadd.f32 %v1014, %v1233
        %v1235 = vpop.f32.mrb[0].mxu0
        %v1236 = vadd.f32 %v1010, %v1235
        %v1237 = vpop.f32.mrb[0].mxu0
        %v1238 = vadd.f32 %v1014, %v1237
        %1239 = vmatprep.mubr.bf16.mxu0 %v1032
        %1240 = vmatmul.mubr.bf16.gmra.mrb[0].mxu0 %v1031
        %v1241 = vpop.f32.mrb[0].mxu0
        %v1242 = vadd.f32 %v1010, %v1241
        %v1243 = vpop.f32.mrb[0].mxu0
        %v1244 = vadd.f32 %v1014, %v1243
        %v1245 = vpop.f32.mrb[0].mxu0
        %v1246 = vadd.f32 %v1010, %v1245
        %v1247 = vpop.f32.mrb[0].mxu0
        %v1248 = vadd.f32 %v1014, %v1247
        %1249 = vdwg.mxu0
        %v1250 = vld [vmem:[%s835] sm:$0xf]
        %v1251 = vld [vmem:[%s835 + $0x4] sm:$0xf]
        %v1252 = vld [vmem:[%s835 + $0x8] sm:$0xf]
        %v1253 = vld [vmem:[%s835 + $0xc] sm:$0xf]
        %v1254 = vld [vmem:[#allocation17] sm:$0xff]
        %v1255 = vld [vmem:[#allocation17 + $0x8] sm:$0xff]
        %v1256 = vld [vmem:[#allocation17 + $0x10] sm:$0xff]
        %v1257 = vld [vmem:[#allocation17 + $0x18] sm:$0xff]
        %v1258 = vld [vmem:[#allocation17 + $0x20] sm:$0xff]
        %v1259 = vld [vmem:[#allocation17 + $0x28] sm:$0xff]
        %v1260 = vld [vmem:[#allocation17 + $0x30] sm:$0xff]
        %v1261 = vld [vmem:[#allocation17 + $0x38] sm:$0xff]
        %v1262 = vld [vmem:[#allocation17 + $0x40] sm:$0xff]
        %v1263 = vld [vmem:[#allocation17 + $0x48] sm:$0xff]
        %v1264 = vld [vmem:[#allocation17 + $0x50] sm:$0xff]
        %v1265 = vld [vmem:[#allocation17 + $0x58] sm:$0xff]
        %v1266 = vld [vmem:[#allocation17 + $0x60] sm:$0xff]
        %v1267 = vld [vmem:[#allocation17 + $0x68] sm:$0xff]
        %v1268 = vld [vmem:[#allocation17 + $0x70] sm:$0xff]
        %v1269 = vld [vmem:[#allocation17 + $0x78] sm:$0xff]
        %v1270 = vld [vmem:[%s11] sm:$0x3]
        %v1272 = vlaneseq
        %v1273 = vshrl.u32 %v1272, 7
        %v1274 = vsub.s32 0, %v1273
        %v1275 = vrot.slane %v1270, %v1274
        %v1276 = vlaneseq
        %v1277 = vshrl.u32 %v1276, 7
        %v1278 = vsub.s32 1, %v1277
        %v1279 = vrot.slane %v1270, %v1278
        %v1286 = vunpack.c.l.b16 %v1250
        %v1287 = vunpack.c.l.b16 %v1251
        %v1288 = vunpack.c.l.b16 %v1252
        %v1289 = vunpack.c.l.b16 %v1253
        %v1290 = vpack.c.b16 %v1287, %v1286
        %v1291 = vpack.c.b16 %v1289, %v1288
        %v1310 = vunpack.c.l.b16 %v1254
        %v1311 = vunpack.c.h.b16 %v1254
        %v1312 = vunpack.c.l.b16 %v1255
        %v1313 = vunpack.c.h.b16 %v1255
        %v1314 = vunpack.c.l.b16 %v1256
        %v1315 = vunpack.c.h.b16 %v1256
        %v1316 = vunpack.c.l.b16 %v1257
        %v1317 = vunpack.c.h.b16 %v1257
        %v1318 = vunpack.c.l.b16 %v1258
        %v1319 = vunpack.c.h.b16 %v1258
        %v1320 = vunpack.c.l.b16 %v1259
        %v1321 = vunpack.c.h.b16 %v1259
        %v1322 = vunpack.c.l.b16 %v1260
        %v1323 = vunpack.c.h.b16 %v1260
        %v1324 = vunpack.c.l.b16 %v1261
        %v1325 = vunpack.c.h.b16 %v1261
        %v1326 = vunpack.c.l.b16 %v1262
        %v1327 = vunpack.c.h.b16 %v1262
        %v1328 = vunpack.c.l.b16 %v1263
        %v1329 = vunpack.c.h.b16 %v1263
        %v1330 = vunpack.c.l.b16 %v1264
        %v1331 = vunpack.c.h.b16 %v1264
        %v1332 = vunpack.c.l.b16 %v1265
        %v1333 = vunpack.c.h.b16 %v1265
        %v1334 = vunpack.c.l.b16 %v1266
        %v1335 = vunpack.c.h.b16 %v1266
        %v1336 = vunpack.c.l.b16 %v1267
        %v1337 = vunpack.c.h.b16 %v1267
        %v1338 = vunpack.c.l.b16 %v1268
        %v1339 = vunpack.c.h.b16 %v1268
        %v1340 = vunpack.c.l.b16 %v1269
        %v1341 = vunpack.c.h.b16 %v1269
        %v1342 = vpack.c.b16 %v1312, %v1310
        %v1343 = vpack.c.b16 %v1313, %v1311
        %v1344 = vpack.c.b16 %v1316, %v1314
        %v1345 = vpack.c.b16 %v1317, %v1315
        %v1346 = vpack.c.b16 %v1320, %v1318
        %v1347 = vpack.c.b16 %v1321, %v1319
        %v1348 = vpack.c.b16 %v1324, %v1322
        %v1349 = vpack.c.b16 %v1325, %v1323
        %v1350 = vpack.c.b16 %v1328, %v1326
        %v1351 = vpack.c.b16 %v1329, %v1327
        %v1352 = vpack.c.b16 %v1332, %v1330
        %v1353 = vpack.c.b16 %v1333, %v1331
        %v1354 = vpack.c.b16 %v1336, %v1334
        %v1355 = vpack.c.b16 %v1337, %v1335
        %v1356 = vpack.c.b16 %v1340, %v1338
        %v1357 = vpack.c.b16 %v1341, %v1339
        %1374 = vmatprep.subr.bf16.mxu0 %v1343
        %1375 = vmatpush1.bf16.msra.mxu0 %v1342
        %1376 = vmatprep.subr.bf16.mxu0 %v1345
        %1377 = vmatpush1.bf16.msra.mxu0 %v1344
        %1378 = vmatprep.subr.bf16.mxu0 %v1347
        %1379 = vmatpush1.bf16.msra.mxu0 %v1346
        %1380 = vmatprep.subr.bf16.mxu0 %v1349
        %1381 = vmatpush1.bf16.msra.mxu0 %v1348
        %1382 = vmatprep.subr.bf16.mxu0 %v1351
        %1383 = vmatpush1.bf16.msra.mxu0 %v1350
        %1384 = vmatprep.subr.bf16.mxu0 %v1353
        %1385 = vmatpush1.bf16.msra.mxu0 %v1352
        %1386 = vmatprep.subr.bf16.mxu0 %v1355
        %1387 = vmatpush1.bf16.msra.mxu0 %v1354
        %1388 = vmatprep.subr.bf16.mxu0 %v1357
        %1389 = vmatpush1.bf16.msra.mxu0 %v1356
        %1390 = vmatprep.subr.bf16.mxu0 0
        %1391 = vmatpush1.bf16.msra.mxu0 0
        %1392 = vmatprep.subr.bf16.mxu0 0
        %1393 = vmatpush1.bf16.msra.mxu0 0
        %1394 = vmatprep.subr.bf16.mxu0 0
        %1395 = vmatpush1.bf16.msra.mxu0 0
        %1396 = vmatprep.subr.bf16.mxu0 0
        %1397 = vmatpush1.bf16.msra.mxu0 0
        %1398 = vmatprep.subr.bf16.mxu0 0
        %1399 = vmatpush1.bf16.msra.mxu0 0
        %1400 = vmatprep.subr.bf16.mxu0 0
        %1401 = vmatpush1.bf16.msra.mxu0 0
        %1402 = vmatprep.subr.bf16.mxu0 0
        %1403 = vmatpush1.bf16.msra.mxu0 0
        %1404 = vmatprep.subr.bf16.mxu0 0
        %1405 = vmatpush1.bf16.msra.mxu0 0
        %1406 = vmatprep.mubr.bf16.mxu0 0
        %1407 = vmatmul.mubr.bf16.gmra.mrb[0].mxu0 %v1290
        %v1408 = vpop.f32.mrb[0].mxu0
        %v1409 = vadd.f32 %v1275, %v1408
        %v1410 = vpop.f32.mrb[0].mxu0
        %v1411 = vadd.f32 %v1279, %v1410
        %v1412 = vpop.f32.mrb[0].mxu0
        %v1413 = vadd.f32 %v1275, %v1412
        %v1414 = vpop.f32.mrb[0].mxu0
        %v1415 = vadd.f32 %v1279, %v1414
        %1416 = vmatprep.mubr.bf16.mxu0 0
        %1417 = vmatmul.mubr.bf16.gmra.mrb[0].mxu0 %v1291
        %v1418 = vpop.f32.mrb[0].mxu0
        %v1419 = vadd.f32 %v1275, %v1418
        %v1420 = vpop.f32.mrb[0].mxu0
        %v1421 = vadd.f32 %v1279, %v1420
        %v1422 = vpop.f32.mrb[0].mxu0
        %v1423 = vadd.f32 %v1275, %v1422
        %v1424 = vpop.f32.mrb[0].mxu0
        %v1425 = vadd.f32 %v1279, %v1424
        %1426 = vdwg.mxu0
        %v1427 = vld [vmem:[#allocation8] sm:$0x1]
        %v1428 = vld [vmem:[#allocation10] sm:$0x1]
        %1429 = vadd.xlane.f32.xlu0 %v1232
        %v1430 = vpop.xlane.xlu0 %1429
        %1431 = vadd.xlane.f32.xlu0 %v1236
        %v1432 = vpop.xlane.xlu0 %1431
        %1433 = vadd.xlane.f32.xlu0 %v1242
        %v1434 = vpop.xlane.xlu0 %1433
        %1435 = vadd.xlane.f32.xlu0 %v1246
        %v1436 = vpop.xlane.xlu0 %1435
        %v1437 = vrcp.pop 128.0
        %v1438 = vmul.f32 %v1430, %v1437
        %v1439 = vmul.f32 %v1432, %v1437
        %v1440 = vmul.f32 %v1434, %v1437
        %v1441 = vmul.f32 %v1436, %v1437
        %v1442 = vmul.f32 %v1232, %v1232
        %v1443 = vmul.f32 %v1236, %v1236
        %v1444 = vmul.f32 %v1242, %v1242
        %v1445 = vmul.f32 %v1246, %v1246
        %1446 = vadd.xlane.f32.xlu0 %v1442
        %v1447 = vpop.xlane.xlu0 %1446
        %1448 = vadd.xlane.f32.xlu0 %v1443
        %v1449 = vpop.xlane.xlu0 %1448
        %1450 = vadd.xlane.f32.xlu0 %v1444
        %v1451 = vpop.xlane.xlu0 %1450
        %1452 = vadd.xlane.f32.xlu0 %v1445
        %v1453 = vpop.xlane.xlu0 %1452
        %v1454 = vmul.f32 %v1447, %v1437
        %v1455 = vmul.f32 %v1449, %v1437
        %v1456 = vmul.f32 %v1451, %v1437
        %v1457 = vmul.f32 %v1453, %v1437
        %v1458 = vmul.f32 %v1438, %v1438
        %v1459 = vmul.f32 %v1439, %v1439
        %v1460 = vmul.f32 %v1440, %v1440
        %v1461 = vmul.f32 %v1441, %v1441
        %v1462 = vsub.f32 %v1454, %v1458
        %v1463 = vsub.f32 %v1455, %v1459
        %v1464 = vsub.f32 %v1456, %v1460
        %v1465 = vsub.f32 %v1457, %v1461
        %v1466 = vsub.f32 %v1232, %v1438
        %v1467 = vsub.f32 %v1236, %v1439
        %v1468 = vsub.f32 %v1242, %v1440
        %v1469 = vsub.f32 %v1246, %v1441
        %v1470 = vadd.f32 %v1462, 1e-05
        %v1471 = vadd.f32 %v1463, 1e-05
        %v1472 = vadd.f32 %v1464, 1e-05
        %v1473 = vadd.f32 %v1465, 1e-05
        %v1474 = vrsqrt.pop %v1470
        %v1475 = vrsqrt.pop %v1471
        %v1476 = vrsqrt.pop %v1472
        %v1477 = vrsqrt.pop %v1473
        %v1478 = vmul.f32 %v1466, %v1474
        %v1479 = vmul.f32 %v1467, %v1475
        %v1480 = vmul.f32 %v1468, %v1476
        %v1481 = vmul.f32 %v1469, %v1477
        %v1483 = vlaneseq
        %v1484 = vshrl.u32 %v1483, 7
        %v1485 = vsub.s32 0, %v1484
        %v1486 = vrot.slane %v1427, %v1485
        %v1488 = vmul.f32 %v1478, %v1486
        %v1489 = vmul.f32 %v1479, %v1486
        %v1490 = vmul.f32 %v1480, %v1486
        %v1491 = vmul.f32 %v1481, %v1486
        %v1493 = vlaneseq
        %v1494 = vshrl.u32 %v1493, 7
        %v1495 = vsub.s32 0, %v1494
        %v1496 = vrot.slane %v1428, %v1495
        %v1498 = vadd.f32 %v1488, %v1496
        %v1499 = vadd.f32 %v1489, %v1496
        %v1500 = vadd.f32 %v1490, %v1496
        %v1501 = vadd.f32 %v1491, %v1496
        %v1502 = vmax.f32 %v1498, 0.0
        %v1503 = vmax.f32 %v1499, 0.0
        %v1504 = vmax.f32 %v1500, 0.0
        %v1505 = vmax.f32 %v1501, 0.0
        %v1506 = vld [vmem:[#allocation11] sm:$0x1]
        %v1507 = vld [vmem:[#allocation13] sm:$0x1]
        %1508 = vadd.xlane.f32.xlu0 %v1234
        %v1509 = vpop.xlane.xlu0 %1508
        %1510 = vadd.xlane.f32.xlu0 %v1238
        %v1511 = vpop.xlane.xlu0 %1510
        %1512 = vadd.xlane.f32.xlu0 %v1244
        %v1513 = vpop.xlane.xlu0 %1512
        %1514 = vadd.xlane.f32.xlu0 %v1248
        %v1515 = vpop.xlane.xlu0 %1514
        %v1516 = vmul.f32 %v1509, %v1437
        %v1517 = vmul.f32 %v1511, %v1437
        %v1518 = vmul.f32 %v1513, %v1437
        %v1519 = vmul.f32 %v1515, %v1437
        %v1520 = vmul.f32 %v1234, %v1234
        %v1521 = vmul.f32 %v1238, %v1238
        %v1522 = vmul.f32 %v1244, %v1244
        %v1523 = vmul.f32 %v1248, %v1248
        %1524 = vadd.xlane.f32.xlu0 %v1520
        %v1525 = vpop.xlane.xlu0 %1524
        %1526 = vadd.xlane.f32.xlu0 %v1521
        %v1527 = vpop.xlane.xlu0 %1526
        %1528 = vadd.xlane.f32.xlu0 %v1522
        %v1529 = vpop.xlane.xlu0 %1528
        %1530 = vadd.xlane.f32.xlu0 %v1523
        %v1531 = vpop.xlane.xlu0 %1530
        %v1532 = vmul.f32 %v1525, %v1437
        %v1533 = vmul.f32 %v1527, %v1437
        %v1534 = vmul.f32 %v1529, %v1437
        %v1535 = vmul.f32 %v1531, %v1437
        %v1536 = vmul.f32 %v1516, %v1516
        %v1537 = vmul.f32 %v1517, %v1517
        %v1538 = vmul.f32 %v1518, %v1518
        %v1539 = vmul.f32 %v1519, %v1519
        %v1540 = vsub.f32 %v1532, %v1536
        %v1541 = vsub.f32 %v1533, %v1537
        %v1542 = vsub.f32 %v1534, %v1538
        %v1543 = vsub.f32 %v1535, %v1539
        %v1544 = vsub.f32 %v1234, %v1516
        %v1545 = vsub.f32 %v1238, %v1517
        %v1546 = vsub.f32 %v1244, %v1518
        %v1547 = vsub.f32 %v1248, %v1519
        %v1548 = vadd.f32 %v1540, 1e-05
        %v1549 = vadd.f32 %v1541, 1e-05
        %v1550 = vadd.f32 %v1542, 1e-05
        %v1551 = vadd.f32 %v1543, 1e-05
        %v1552 = vrsqrt.pop %v1548
        %v1553 = vrsqrt.pop %v1549
        %v1554 = vrsqrt.pop %v1550
        %v1555 = vrsqrt.pop %v1551
        %v1556 = vmul.f32 %v1544, %v1552
        %v1557 = vmul.f32 %v1545, %v1553
        %v1558 = vmul.f32 %v1546, %v1554
        %v1559 = vmul.f32 %v1547, %v1555
        %v1561 = vlaneseq
        %v1562 = vshrl.u32 %v1561, 7
        %v1563 = vsub.s32 0, %v1562
        %v1564 = vrot.slane %v1506, %v1563
        %v1566 = vmul.f32 %v1556, %v1564
        %v1567 = vmul.f32 %v1557, %v1564
        %v1568 = vmul.f32 %v1558, %v1564
        %v1569 = vmul.f32 %v1559, %v1564
        %v1571 = vlaneseq
        %v1572 = vshrl.u32 %v1571, 7
        %v1573 = vsub.s32 0, %v1572
        %v1574 = vrot.slane %v1507, %v1573
        %v1576 = vadd.f32 %v1566, %v1574
        %v1577 = vadd.f32 %v1567, %v1574
        %v1578 = vadd.f32 %v1568, %v1574
        %v1579 = vadd.f32 %v1569, %v1574
        %v1580 = vmax.f32 %v1576, 0.0
        %v1581 = vmax.f32 %v1577, 0.0
        %v1582 = vmax.f32 %v1578, 0.0
        %v1583 = vmax.f32 %v1579, 0.0
        %v1584 = vld [vmem:[#allocation19] sm:$0x1]
        %v1585 = vld [vmem:[#allocation20] sm:$0x1]
        %1586 = vadd.xlane.f32.xlu0 %v1409
        %v1587 = vpop.xlane.xlu0 %1586
        %1588 = vadd.xlane.f32.xlu0 %v1413
        %v1589 = vpop.xlane.xlu0 %1588
        %1590 = vadd.xlane.f32.xlu0 %v1419
        %v1591 = vpop.xlane.xlu0 %1590
        %1592 = vadd.xlane.f32.xlu0 %v1423
        %v1593 = vpop.xlane.xlu0 %1592
        %v1594 = vmul.f32 %v1587, %v1437
        %v1595 = vmul.f32 %v1589, %v1437
        %v1596 = vmul.f32 %v1591, %v1437
        %v1597 = vmul.f32 %v1593, %v1437
        %v1598 = vmul.f32 %v1409, %v1409
        %v1599 = vmul.f32 %v1413, %v1413
        %v1600 = vmul.f32 %v1419, %v1419
        %v1601 = vmul.f32 %v1423, %v1423
        %1602 = vadd.xlane.f32.xlu0 %v1598
        %v1603 = vpop.xlane.xlu0 %1602
        %1604 = vadd.xlane.f32.xlu0 %v1599
        %v1605 = vpop.xlane.xlu0 %1604
        %1606 = vadd.xlane.f32.xlu0 %v1600
        %v1607 = vpop.xlane.xlu0 %1606
        %1608 = vadd.xlane.f32.xlu0 %v1601
        %v1609 = vpop.xlane.xlu0 %1608
        %v1610 = vmul.f32 %v1603, %v1437
        %v1611 = vmul.f32 %v1605, %v1437
        %v1612 = vmul.f32 %v1607, %v1437
        %v1613 = vmul.f32 %v1609, %v1437
        %v1614 = vmul.f32 %v1594, %v1594
        %v1615 = vmul.f32 %v1595, %v1595
        %v1616 = vmul.f32 %v1596, %v1596
        %v1617 = vmul.f32 %v1597, %v1597
        %v1618 = vsub.f32 %v1610, %v1614
        %v1619 = vsub.f32 %v1611, %v1615
        %v1620 = vsub.f32 %v1612, %v1616
        %v1621 = vsub.f32 %v1613, %v1617
        %v1622 = vsub.f32 %v1409, %v1594
        %v1623 = vsub.f32 %v1413, %v1595
        %v1624 = vsub.f32 %v1419, %v1596
        %v1625 = vsub.f32 %v1423, %v1597
        %v1626 = vadd.f32 %v1618, 1e-05
        %v1627 = vadd.f32 %v1619, 1e-05
        %v1628 = vadd.f32 %v1620, 1e-05
        %v1629 = vadd.f32 %v1621, 1e-05
        %v1630 = vrsqrt.pop %v1626
        %v1631 = vrsqrt.pop %v1627
        %v1632 = vrsqrt.pop %v1628
        %v1633 = vrsqrt.pop %v1629
        %v1634 = vmul.f32 %v1622, %v1630
        %v1635 = vmul.f32 %v1623, %v1631
        %v1636 = vmul.f32 %v1624, %v1632
        %v1637 = vmul.f32 %v1625, %v1633
        %v1639 = vlaneseq
        %v1640 = vshrl.u32 %v1639, 7
        %v1641 = vsub.s32 0, %v1640
        %v1642 = vrot.slane %v1584, %v1641
        %v1644 = vmul.f32 %v1634, %v1642
        %v1645 = vmul.f32 %v1635, %v1642
        %v1646 = vmul.f32 %v1636, %v1642
        %v1647 = vmul.f32 %v1637, %v1642
        %v1649 = vlaneseq
        %v1650 = vshrl.u32 %v1649, 7
        %v1651 = vsub.s32 0, %v1650
        %v1652 = vrot.slane %v1585, %v1651
        %v1654 = vadd.f32 %v1644, %v1652
        %v1655 = vadd.f32 %v1645, %v1652
        %v1656 = vadd.f32 %v1646, %v1652
        %v1657 = vadd.f32 %v1647, %v1652
        %v1658 = vmax.f32 %v1654, 0.0
        %v1659 = vmax.f32 %v1655, 0.0
        %v1660 = vmax.f32 %v1656, 0.0
        %v1661 = vmax.f32 %v1657, 0.0
        %v1662 = vld [vmem:[#allocation22] sm:$0x1]
        %v1663 = vld [vmem:[#allocation23] sm:$0x1]
        %1664 = vadd.xlane.f32.xlu0 %v1411
        %v1665 = vpop.xlane.xlu0 %1664
        %1666 = vadd.xlane.f32.xlu0 %v1415
        %v1667 = vpop.xlane.xlu0 %1666
        %1668 = vadd.xlane.f32.xlu0 %v1421
        %v1669 = vpop.xlane.xlu0 %1668
        %1670 = vadd.xlane.f32.xlu0 %v1425
        %v1671 = vpop.xlane.xlu0 %1670
        %v1672 = vmul.f32 %v1665, %v1437
        %v1673 = vmul.f32 %v1667, %v1437
        %v1674 = vmul.f32 %v1669, %v1437
        %v1675 = vmul.f32 %v1671, %v1437
        %v1676 = vmul.f32 %v1411, %v1411
        %v1677 = vmul.f32 %v1415, %v1415
        %v1678 = vmul.f32 %v1421, %v1421
        %v1679 = vmul.f32 %v1425, %v1425
        %1680 = vadd.xlane.f32.xlu0 %v1676
        %v1681 = vpop.xlane.xlu0 %1680
        %1682 = vadd.xlane.f32.xlu0 %v1677
        %v1683 = vpop.xlane.xlu0 %1682
        %1684 = vadd.xlane.f32.xlu0 %v1678
        %v1685 = vpop.xlane.xlu0 %1684
        %1686 = vadd.xlane.f32.xlu0 %v1679
        %v1687 = vpop.xlane.xlu0 %1686
        %v1688 = vmul.f32 %v1681, %v1437
        %v1689 = vmul.f32 %v1683, %v1437
        %v1690 = vmul.f32 %v1685, %v1437
        %v1691 = vmul.f32 %v1687, %v1437
        %v1692 = vmul.f32 %v1672, %v1672
        %v1693 = vmul.f32 %v1673, %v1673
        %v1694 = vmul.f32 %v1674, %v1674
        %v1695 = vmul.f32 %v1675, %v1675
        %v1696 = vsub.f32 %v1688, %v1692
        %v1697 = vsub.f32 %v1689, %v1693
        %v1698 = vsub.f32 %v1690, %v1694
        %v1699 = vsub.f32 %v1691, %v1695
        %v1700 = vsub.f32 %v1411, %v1672
        %v1701 = vsub.f32 %v1415, %v1673
        %v1702 = vsub.f32 %v1421, %v1674
        %v1703 = vsub.f32 %v1425, %v1675
        %v1704 = vadd.f32 %v1696, 1e-05
        %v1705 = vadd.f32 %v1697, 1e-05
        %v1706 = vadd.f32 %v1698, 1e-05
        %v1707 = vadd.f32 %v1699, 1e-05
        %v1708 = vrsqrt.pop %v1704
        %v1709 = vrsqrt.pop %v1705
        %v1710 = vrsqrt.pop %v1706
        %v1711 = vrsqrt.pop %v1707
        %v1712 = vmul.f32 %v1700, %v1708
        %v1713 = vmul.f32 %v1701, %v1709
        %v1714 = vmul.f32 %v1702, %v1710
        %v1715 = vmul.f32 %v1703, %v1711
        %v1717 = vlaneseq
        %v1718 = vshrl.u32 %v1717, 7
        %v1719 = vsub.s32 0, %v1718
        %v1720 = vrot.slane %v1662, %v1719
        %v1722 = vmul.f32 %v1712, %v1720
        %v1723 = vmul.f32 %v1713, %v1720
        %v1724 = vmul.f32 %v1714, %v1720
        %v1725 = vmul.f32 %v1715, %v1720
        %v1727 = vlaneseq
        %v1728 = vshrl.u32 %v1727, 7
        %v1729 = vsub.s32 0, %v1728
        %v1730 = vrot.slane %v1663, %v1729
        %v1732 = vadd.f32 %v1722, %v1730
        %v1733 = vadd.f32 %v1723, %v1730
        %v1734 = vadd.f32 %v1724, %v1730
        %v1735 = vadd.f32 %v1725, %v1730
        %v1736 = vmax.f32 %v1732, 0.0
        %v1737 = vmax.f32 %v1733, 0.0
        %v1738 = vmax.f32 %v1734, 0.0
        %v1739 = vmax.f32 %v1735, 0.0
        %v1740 = vpack.c.bf16 %v1581, %v1580
        %v1741 = vpack.c.bf16 %v1583, %v1582
        %v1742 = vld [vmem:[#allocation14] sm:$0xf]
        %v1743 = vld [vmem:[#allocation14 + $0x4] sm:$0xf]
        %v1744 = vld [vmem:[#allocation14 + $0x8] sm:$0xf]
        %v1745 = vld [vmem:[#allocation14 + $0xc] sm:$0xf]
        %v1746 = vld [vmem:[#allocation14 + $0x10] sm:$0xf]
        %v1747 = vld [vmem:[#allocation14 + $0x14] sm:$0xf]
        %v1748 = vld [vmem:[#allocation14 + $0x18] sm:$0xf]
        %v1749 = vld [vmem:[#allocation14 + $0x1c] sm:$0xf]
        %v1750 = vld [vmem:[#allocation14 + $0x20] sm:$0xf]
        %v1751 = vld [vmem:[#allocation14 + $0x24] sm:$0xf]
        %v1752 = vld [vmem:[#allocation14 + $0x28] sm:$0xf]
        %v1753 = vld [vmem:[#allocation14 + $0x2c] sm:$0xf]
        %v1754 = vld [vmem:[#allocation14 + $0x30] sm:$0xf]
        %v1755 = vld [vmem:[#allocation14 + $0x34] sm:$0xf]
        %v1756 = vld [vmem:[#allocation14 + $0x38] sm:$0xf]
        %v1757 = vld [vmem:[#allocation14 + $0x3c] sm:$0xf]
        %v1758 = vld [vmem:[#allocation16] sm:$0x1]
        %v1760 = vlaneseq
        %v1761 = vshrl.u32 %v1760, 7
        %v1762 = vsub.s32 0, %v1761
        %v1763 = vrot.slane %v1758, %v1762
        %v1781 = vunpack.c.l.b16 %v1742
        %v1782 = vunpack.c.l.b16 %v1743
        %v1783 = vunpack.c.l.b16 %v1744
        %v1784 = vunpack.c.l.b16 %v1745
        %v1785 = vunpack.c.l.b16 %v1746
        %v1786 = vunpack.c.l.b16 %v1747
        %v1787 = vunpack.c.l.b16 %v1748
        %v1788 = vunpack.c.l.b16 %v1749
        %v1789 = vunpack.c.l.b16 %v1750
        %v1790 = vunpack.c.l.b16 %v1751
        %v1791 = vunpack.c.l.b16 %v1752
        %v1792 = vunpack.c.l.b16 %v1753
        %v1793 = vunpack.c.l.b16 %v1754
        %v1794 = vunpack.c.l.b16 %v1755
        %v1795 = vunpack.c.l.b16 %v1756
        %v1796 = vunpack.c.l.b16 %v1757
        %v1797 = vpack.c.b16 %v1782, %v1781
        %v1798 = vpack.c.b16 %v1784, %v1783
        %v1799 = vpack.c.b16 %v1786, %v1785
        %v1800 = vpack.c.b16 %v1788, %v1787
        %v1801 = vpack.c.b16 %v1790, %v1789
        %v1802 = vpack.c.b16 %v1792, %v1791
        %v1803 = vpack.c.b16 %v1794, %v1793
        %v1804 = vpack.c.b16 %v1796, %v1795
        %1813 = vmatprep.subr.bf16.mxu0 0
        %1814 = vmatpush1.bf16.msra.mxu0 %v1797
        %1815 = vmatprep.subr.bf16.mxu0 0
        %1816 = vmatpush1.bf16.msra.mxu0 %v1798
        %1817 = vmatprep.subr.bf16.mxu0 0
        %1818 = vmatpush1.bf16.msra.mxu0 %v1799
        %1819 = vmatprep.subr.bf16.mxu0 0
        %1820 = vmatpush1.bf16.msra.mxu0 %v1800
        %1821 = vmatprep.subr.bf16.mxu0 0
        %1822 = vmatpush1.bf16.msra.mxu0 %v1801
        %1823 = vmatprep.subr.bf16.mxu0 0
        %1824 = vmatpush1.bf16.msra.mxu0 %v1802
        %1825 = vmatprep.subr.bf16.mxu0 0
        %1826 = vmatpush1.bf16.msra.mxu0 %v1803
        %1827 = vmatprep.subr.bf16.mxu0 0
        %1828 = vmatpush1.bf16.msra.mxu0 %v1804
        %1829 = vmatprep.subr.bf16.mxu0 0
        %1830 = vmatpush1.bf16.msra.mxu0 0
        %1831 = vmatprep.subr.bf16.mxu0 0
        %1832 = vmatpush1.bf16.msra.mxu0 0
        %1833 = vmatprep.subr.bf16.mxu0 0
        %1834 = vmatpush1.bf16.msra.mxu0 0
        %1835 = vmatprep.subr.bf16.mxu0 0
        %1836 = vmatpush1.bf16.msra.mxu0 0
        %1837 = vmatprep.subr.bf16.mxu0 0
        %1838 = vmatpush1.bf16.msra.mxu0 0
        %1839 = vmatprep.subr.bf16.mxu0 0
        %1840 = vmatpush1.bf16.msra.mxu0 0
        %1841 = vmatprep.subr.bf16.mxu0 0
        %1842 = vmatpush1.bf16.msra.mxu0 0
        %1843 = vmatprep.subr.bf16.mxu0 0
        %1844 = vmatpush1.bf16.msra.mxu0 0
        %1845 = vmatprep.mubr.bf16.mxu0 0
        %1846 = vmatmul.mubr.bf16.gmra.mrb[0].mxu0 %v1740
        %v1847 = vpop.f32.mrb[0].mxu0
        %v1848 = vadd.f32 %v1763, %v1847
        %v1849 = vpop.f32.mrb[0].mxu0
        %v1850 = vpop.f32.mrb[0].mxu0
        %v1851 = vadd.f32 %v1763, %v1850
        %v1852 = vpop.f32.mrb[0].mxu0
        %1853 = vmatprep.mubr.bf16.mxu0 0
        %1854 = vmatmul.mubr.bf16.gmra.mrb[0].mxu0 %v1741
        %v1855 = vpop.f32.mrb[0].mxu0
        %v1856 = vadd.f32 %v1763, %v1855
        %v1857 = vpop.f32.mrb[0].mxu0
        %v1858 = vpop.f32.mrb[0].mxu0
        %v1859 = vadd.f32 %v1763, %v1858
        %v1860 = vpop.f32.mrb[0].mxu0
        %1861 = vdwg.mxu0
        %v1862 = vpack.c.bf16 %v1737, %v1736
        %v1863 = vpack.c.bf16 %v1739, %v1738
        %v1864 = vld [vmem:[#allocation25] sm:$0xf]
        %v1865 = vld [vmem:[#allocation25 + $0x4] sm:$0xf]
        %v1866 = vld [vmem:[#allocation25 + $0x8] sm:$0xf]
        %v1867 = vld [vmem:[#allocation25 + $0xc] sm:$0xf]
        %v1868 = vld [vmem:[#allocation25 + $0x10] sm:$0xf]
        %v1869 = vld [vmem:[#allocation25 + $0x14] sm:$0xf]
        %v1870 = vld [vmem:[#allocation25 + $0x18] sm:$0xf]
        %v1871 = vld [vmem:[#allocation25 + $0x1c] sm:$0xf]
        %v1872 = vld [vmem:[#allocation25 + $0x20] sm:$0xf]
        %v1873 = vld [vmem:[#allocation25 + $0x24] sm:$0xf]
        %v1874 = vld [vmem:[#allocation25 + $0x28] sm:$0xf]
        %v1875 = vld [vmem:[#allocation25 + $0x2c] sm:$0xf]
        %v1876 = vld [vmem:[#allocation25 + $0x30] sm:$0xf]
        %v1877 = vld [vmem:[#allocation25 + $0x34] sm:$0xf]
        %v1878 = vld [vmem:[#allocation25 + $0x38] sm:$0xf]
        %v1879 = vld [vmem:[#allocation25 + $0x3c] sm:$0xf]
        %v1880 = vld [vmem:[#allocation26] sm:$0x1]
        %v1882 = vlaneseq
        %v1883 = vshrl.u32 %v1882, 7
        %v1884 = vsub.s32 0, %v1883
        %v1885 = vrot.slane %v1880, %v1884
        %v1903 = vunpack.c.l.b16 %v1864
        %v1904 = vunpack.c.l.b16 %v1865
        %v1905 = vunpack.c.l.b16 %v1866
        %v1906 = vunpack.c.l.b16 %v1867
        %v1907 = vunpack.c.l.b16 %v1868
        %v1908 = vunpack.c.l.b16 %v1869
        %v1909 = vunpack.c.l.b16 %v1870
        %v1910 = vunpack.c.l.b16 %v1871
        %v1911 = vunpack.c.l.b16 %v1872
        %v1912 = vunpack.c.l.b16 %v1873
        %v1913 = vunpack.c.l.b16 %v1874
        %v1914 = vunpack.c.l.b16 %v1875
        %v1915 = vunpack.c.l.b16 %v1876
        %v1916 = vunpack.c.l.b16 %v1877
        %v1917 = vunpack.c.l.b16 %v1878
        %v1918 = vunpack.c.l.b16 %v1879
        %v1919 = vpack.c.b16 %v1904, %v1903
        %v1920 = vpack.c.b16 %v1906, %v1905
        %v1921 = vpack.c.b16 %v1908, %v1907
        %v1922 = vpack.c.b16 %v1910, %v1909
        %v1923 = vpack.c.b16 %v1912, %v1911
        %v1924 = vpack.c.b16 %v1914, %v1913
        %v1925 = vpack.c.b16 %v1916, %v1915
        %v1926 = vpack.c.b16 %v1918, %v1917
        %1935 = vmatprep.subr.bf16.mxu0 0
        %1936 = vmatpush1.bf16.msra.mxu0 %v1919
        %1937 = vmatprep.subr.bf16.mxu0 0
        %1938 = vmatpush1.bf16.msra.mxu0 %v1920
        %1939 = vmatprep.subr.bf16.mxu0 0
        %1940 = vmatpush1.bf16.msra.mxu0 %v1921
        %1941 = vmatprep.subr.bf16.mxu0 0
        %1942 = vmatpush1.bf16.msra.mxu0 %v1922
        %1943 = vmatprep.subr.bf16.mxu0 0
        %1944 = vmatpush1.bf16.msra.mxu0 %v1923
        %1945 = vmatprep.subr.bf16.mxu0 0
        %1946 = vmatpush1.bf16.msra.mxu0 %v1924
        %1947 = vmatprep.subr.bf16.mxu0 0
        %1948 = vmatpush1.bf16.msra.mxu0 %v1925
        %1949 = vmatprep.subr.bf16.mxu0 0
        %1950 = vmatpush1.bf16.msra.mxu0 %v1926
        %1951 = vmatprep.subr.bf16.mxu0 0
        %1952 = vmatpush1.bf16.msra.mxu0 0
        %1953 = vmatprep.subr.bf16.mxu0 0
        %1954 = vmatpush1.bf16.msra.mxu0 0
        %1955 = vmatprep.subr.bf16.mxu0 0
        %1956 = vmatpush1.bf16.msra.mxu0 0
        %1957 = vmatprep.subr.bf16.mxu0 0
        %1958 = vmatpush1.bf16.msra.mxu0 0
        %1959 = vmatprep.subr.bf16.mxu0 0
        %1960 = vmatpush1.bf16.msra.mxu0 0
        %1961 = vmatprep.subr.bf16.mxu0 0
        %1962 = vmatpush1.bf16.msra.mxu0 0
        %1963 = vmatprep.subr.bf16.mxu0 0
        %1964 = vmatpush1.bf16.msra.mxu0 0
        %1965 = vmatprep.subr.bf16.mxu0 0
        %1966 = vmatpush1.bf16.msra.mxu0 0
        %1967 = vmatprep.mubr.bf16.mxu0 0
        %1968 = vmatmul.mubr.bf16.gmra.mrb[0].mxu0 %v1862
        %v1969 = vpop.f32.mrb[0].mxu0
        %v1970 = vadd.f32 %v1885, %v1969
        %v1971 = vpop.f32.mrb[0].mxu0
        %v1972 = vpop.f32.mrb[0].mxu0
        %v1973 = vadd.f32 %v1885, %v1972
        %v1974 = vpop.f32.mrb[0].mxu0
        %1975 = vmatprep.mubr.bf16.mxu0 0
        %1976 = vmatmul.mubr.bf16.gmra.mrb[0].mxu0 %v1863
        %v1977 = vpop.f32.mrb[0].mxu0
        %v1978 = vadd.f32 %v1885, %v1977
        %v1979 = vpop.f32.mrb[0].mxu0
        %v1980 = vpop.f32.mrb[0].mxu0
        %v1981 = vadd.f32 %v1885, %v1980
        %v1982 = vpop.f32.mrb[0].mxu0
        %1983 = vdwg.mxu0
        %v1984 = vsub.f32 %v1848, %v1970
        %v1985 = vsub.f32 %v1851, %v1973
        %v1986 = vsub.f32 %v1856, %v1978
        %v1987 = vsub.f32 %v1859, %v1981
        %v1988 = vmul.f32 %v1984, 0.5
        %v1989 = vmul.f32 %v1985, 0.5
        %v1990 = vmul.f32 %v1986, 0.5
        %v1991 = vmul.f32 %v1987, 0.5
        %v1992 = vtanh.pop %v1988
        %v1993 = vtanh.pop %v1989
        %v1994 = vtanh.pop %v1990
        %v1995 = vtanh.pop %v1991
        %v1996 = vadd.f32 %v1992, 1.0
        %v1997 = vadd.f32 %v1993, 1.0
        %v1998 = vadd.f32 %v1994, 1.0
        %v1999 = vadd.f32 %v1995, 1.0
        %v2000 = vmul.f32 %v1996, 0.5
        %v2001 = vmul.f32 %v1997, 0.5
        %v2002 = vmul.f32 %v1998, 0.5
        %v2003 = vmul.f32 %v1999, 0.5
        %v2004 = vsub.f32 %v1658, %v1502
        %v2005 = vsub.f32 %v1659, %v1503
        %v2006 = vsub.f32 %v1660, %v1504
        %v2007 = vsub.f32 %v1661, %v1505
        %v2008 = vmul.f32 %v2004, %v2000
        %v2009 = vmul.f32 %v2005, %v2001
        %v2010 = vmul.f32 %v2006, %v2002
        %v2011 = vmul.f32 %v2007, %v2003
        %v2012 = vadd.f32 %v1502, %v2008
        %v2013 = vadd.f32 %v1503, %v2009
        %v2014 = vadd.f32 %v1504, %v2010
        %v2015 = vadd.f32 %v1505, %v2011
        %v2016 = vpack.c.bf16 %v2013, %v2012
        %v2017 = vpack.c.bf16 %v2015, %v2014
        %v2018 = vld [vmem:[%s18] sm:$0xf]
        %v2019 = vld [vmem:[%s18 + $0x4] sm:$0xf]
        %v2020 = vld [vmem:[%s18 + $0x8] sm:$0xf]
        %v2021 = vld [vmem:[%s18 + $0xc] sm:$0xf]
        %v2022 = vld [vmem:[%s18 + $0x10] sm:$0xf]
        %v2023 = vld [vmem:[%s18 + $0x14] sm:$0xf]
        %v2024 = vld [vmem:[%s18 + $0x18] sm:$0xf]
        %v2025 = vld [vmem:[%s18 + $0x1c] sm:$0xf]
        %v2026 = vld [vmem:[%s18 + $0x20] sm:$0xf]
        %v2027 = vld [vmem:[%s18 + $0x24] sm:$0xf]
        %v2028 = vld [vmem:[%s18 + $0x28] sm:$0xf]
        %v2029 = vld [vmem:[%s18 + $0x2c] sm:$0xf]
        %v2030 = vld [vmem:[%s18 + $0x30] sm:$0xf]
        %v2031 = vld [vmem:[%s18 + $0x34] sm:$0xf]
        %v2032 = vld [vmem:[%s18 + $0x38] sm:$0xf]
        %v2033 = vld [vmem:[%s18 + $0x3c] sm:$0xf]
        %v2034 = vld [vmem:[%s19] sm:$0x1]
        %v2036 = vlaneseq
        %v2037 = vshrl.u32 %v2036, 7
        %v2038 = vsub.s32 0, %v2037
        %v2039 = vrot.slane %v2034, %v2038
        %v2057 = vunpack.c.l.b16 %v2018
        %v2058 = vunpack.c.l.b16 %v2019
        %v2059 = vunpack.c.l.b16 %v2020
        %v2060 = vunpack.c.l.b16 %v2021
        %v2061 = vunpack.c.l.b16 %v2022
        %v2062 = vunpack.c.l.b16 %v2023
        %v2063 = vunpack.c.l.b16 %v2024
        %v2064 = vunpack.c.l.b16 %v2025
        %v2065 = vunpack.c.l.b16 %v2026
        %v2066 = vunpack.c.l.b16 %v2027
        %v2067 = vunpack.c.l.b16 %v2028
        %v2068 = vunpack.c.l.b16 %v2029
        %v2069 = vunpack.c.l.b16 %v2030
        %v2070 = vunpack.c.l.b16 %v2031
        %v2071 = vunpack.c.l.b16 %v2032
        %v2072 = vunpack.c.l.b16 %v2033
        %v2073 = vpack.c.b16 %v2058, %v2057
        %v2074 = vpack.c.b16 %v2060, %v2059
        %v2075 = vpack.c.b16 %v2062, %v2061
        %v2076 = vpack.c.b16 %v2064, %v2063
        %v2077 = vpack.c.b16 %v2066, %v2065
        %v2078 = vpack.c.b16 %v2068, %v2067
        %v2079 = vpack.c.b16 %v2070, %v2069
        %v2080 = vpack.c.b16 %v2072, %v2071
        %2089 = vmatprep.subr.bf16.mxu0 0
        %2090 = vmatpush1.bf16.msra.mxu0 %v2073
        %2091 = vmatprep.subr.bf16.mxu0 0
        %2092 = vmatpush1.bf16.msra.mxu0 %v2074
        %2093 = vmatprep.subr.bf16.mxu0 0
        %2094 = vmatpush1.bf16.msra.mxu0 %v2075
        %2095 = vmatprep.subr.bf16.mxu0 0
        %2096 = vmatpush1.bf16.msra.mxu0 %v2076
        %2097 = vmatprep.subr.bf16.mxu0 0
        %2098 = vmatpush1.bf16.msra.mxu0 %v2077
        %2099 = vmatprep.subr.bf16.mxu0 0
        %2100 = vmatpush1.bf16.msra.mxu0 %v2078
        %2101 = vmatprep.subr.bf16.mxu0 0
        %2102 = vmatpush1.bf16.msra.mxu0 %v2079
        %2103 = vmatprep.subr.bf16.mxu0 0
        %2104 = vmatpush1.bf16.msra.mxu0 %v2080
        %2105 = vmatprep.subr.bf16.mxu0 0
        %2106 = vmatpush1.bf16.msra.mxu0 0
        %2107 = vmatprep.subr.bf16.mxu0 0
        %2108 = vmatpush1.bf16.msra.mxu0 0
        %2109 = vmatprep.subr.bf16.mxu0 0
        %2110 = vmatpush1.bf16.msra.mxu0 0
        %2111 = vmatprep.subr.bf16.mxu0 0
        %2112 = vmatpush1.bf16.msra.mxu0 0
        %2113 = vmatprep.subr.bf16.mxu0 0
        %2114 = vmatpush1.bf16.msra.mxu0 0
        %2115 = vmatprep.subr.bf16.mxu0 0
        %2116 = vmatpush1.bf16.msra.mxu0 0
        %2117 = vmatprep.subr.bf16.mxu0 0
        %2118 = vmatpush1.bf16.msra.mxu0 0
        %2119 = vmatprep.subr.bf16.mxu0 0
        %2120 = vmatpush1.bf16.msra.mxu0 0
        %2121 = vmatprep.mubr.bf16.mxu0 0
        %2122 = vmatmul.mubr.bf16.gmra.mrb[0].mxu0 %v2016
        %v2123 = vpop.f32.mrb[0].mxu0
        %v2124 = vadd.f32 %v2039, %v2123
        %v2125 = vpop.f32.mrb[0].mxu0
        %v2126 = vpop.f32.mrb[0].mxu0
        %v2127 = vadd.f32 %v2039, %v2126
        %v2128 = vpop.f32.mrb[0].mxu0
        %2129 = vmatprep.mubr.bf16.mxu0 0
        %2130 = vmatmul.mubr.bf16.gmra.mrb[0].mxu0 %v2017
        %v2131 = vpop.f32.mrb[0].mxu0
        %v2132 = vadd.f32 %v2039, %v2131
        %v2133 = vpop.f32.mrb[0].mxu0
        %v2134 = vpop.f32.mrb[0].mxu0
        %v2135 = vadd.f32 %v2039, %v2134
        %v2136 = vpop.f32.mrb[0].mxu0
        %2137 = vdwg.mxu0
        %v2138 = vld [vmem:[%s20] sm:$0x1]
        %v2139 = vld [vmem:[%s21] sm:$0x1]
        %2140 = vadd.xlane.f32.xlu0 %v2124
        %v2141 = vpop.xlane.xlu0 %2140
        %2142 = vadd.xlane.f32.xlu0 %v2127
        %v2143 = vpop.xlane.xlu0 %2142
        %2144 = vadd.xlane.f32.xlu0 %v2132
        %v2145 = vpop.xlane.xlu0 %2144
        %2146 = vadd.xlane.f32.xlu0 %v2135
        %v2147 = vpop.xlane.xlu0 %2146
        %v2148 = vmul.f32 %v2141, %v1437
        %v2149 = vmul.f32 %v2143, %v1437
        %v2150 = vmul.f32 %v2145, %v1437
        %v2151 = vmul.f32 %v2147, %v1437
        %v2152 = vmul.f32 %v2124, %v2124
        %v2153 = vmul.f32 %v2127, %v2127
        %v2154 = vmul.f32 %v2132, %v2132
        %v2155 = vmul.f32 %v2135, %v2135
        %2156 = vadd.xlane.f32.xlu0 %v2152
        %v2157 = vpop.xlane.xlu0 %2156
        %2158 = vadd.xlane.f32.xlu0 %v2153
        %v2159 = vpop.xlane.xlu0 %2158
        %2160 = vadd.xlane.f32.xlu0 %v2154
        %v2161 = vpop.xlane.xlu0 %2160
        %2162 = vadd.xlane.f32.xlu0 %v2155
        %v2163 = vpop.xlane.xlu0 %2162
        %v2164 = vmul.f32 %v2157, %v1437
        %v2165 = vmul.f32 %v2159, %v1437
        %v2166 = vmul.f32 %v2161, %v1437
        %v2167 = vmul.f32 %v2163, %v1437
        %v2168 = vmul.f32 %v2148, %v2148
        %v2169 = vmul.f32 %v2149, %v2149
        %v2170 = vmul.f32 %v2150, %v2150
        %v2171 = vmul.f32 %v2151, %v2151
        %v2172 = vsub.f32 %v2164, %v2168
        %v2173 = vsub.f32 %v2165, %v2169
        %v2174 = vsub.f32 %v2166, %v2170
        %v2175 = vsub.f32 %v2167, %v2171
        %v2176 = vsub.f32 %v2124, %v2148
        %v2177 = vsub.f32 %v2127, %v2149
        %v2178 = vsub.f32 %v2132, %v2150
        %v2179 = vsub.f32 %v2135, %v2151
        %v2180 = vadd.f32 %v2172, 1e-05
        %v2181 = vadd.f32 %v2173, 1e-05
        %v2182 = vadd.f32 %v2174, 1e-05
        %v2183 = vadd.f32 %v2175, 1e-05
        %v2184 = vrsqrt.pop %v2180
        %v2185 = vrsqrt.pop %v2181
        %v2186 = vrsqrt.pop %v2182
        %v2187 = vrsqrt.pop %v2183
        %v2188 = vmul.f32 %v2176, %v2184
        %v2189 = vmul.f32 %v2177, %v2185
        %v2190 = vmul.f32 %v2178, %v2186
        %v2191 = vmul.f32 %v2179, %v2187
        %v2193 = vlaneseq
        %v2194 = vshrl.u32 %v2193, 7
        %v2195 = vsub.s32 0, %v2194
        %v2196 = vrot.slane %v2138, %v2195
        %v2198 = vmul.f32 %v2188, %v2196
        %v2199 = vmul.f32 %v2189, %v2196
        %v2200 = vmul.f32 %v2190, %v2196
        %v2201 = vmul.f32 %v2191, %v2196
        %v2203 = vlaneseq
        %v2204 = vshrl.u32 %v2203, 7
        %v2205 = vsub.s32 0, %v2204
        %v2206 = vrot.slane %v2139, %v2205
        %v2208 = vadd.f32 %v2198, %v2206
        %v2209 = vadd.f32 %v2199, %v2206
        %v2210 = vadd.f32 %v2200, %v2206
        %v2211 = vadd.f32 %v2201, %v2206
        %v2212 = vmax.f32 %v2208, 0.0
        %v2213 = vmax.f32 %v2209, 0.0
        %v2214 = vmax.f32 %v2210, 0.0
        %v2215 = vmax.f32 %v2211, 0.0
        %2216 = vst [vmem:[%s956] sm:$0xff] %v2212
        %2217 = vst [vmem:[%s956 + $0x8] sm:$0xff] %v2213
        %2218 = vst [vmem:[%s956 + $0x10] sm:$0xff] %v2214
        %2219 = vst [vmem:[%s956 + $0x18] sm:$0xff] %v2215
        %v2220 = vpack.c.bf16 %v1503, %v1502
        %v2221 = vpack.c.bf16 %v1659, %v1658
        %v2222 = vpack.c.bf16 %v1851, %v1848
        %v2223 = vpack.c.bf16 %v1973, %v1970
        %v2224 = vpack.c.bf16 %v1505, %v1504
        %v2225 = vpack.c.bf16 %v1661, %v1660
        %v2226 = vpack.c.bf16 %v1859, %v1856
        %v2227 = vpack.c.bf16 %v1981, %v1978
        %v2236 = vunpack.c.l.b16 %v2220
        %v2237 = vunpack.c.l.b16 %v2221
        %v2238 = vunpack.c.l.b16 %v2222
        %v2239 = vunpack.c.l.b16 %v2223
        %v2240 = vunpack.c.h.b16 %v2220
        %v2241 = vunpack.c.h.b16 %v2221
        %v2242 = vunpack.c.h.b16 %v2222
        %v2243 = vunpack.c.h.b16 %v2223
        %v2244 = vunpack.c.l.b16 %v2224
        %v2245 = vunpack.c.l.b16 %v2225
        %v2246 = vunpack.c.l.b16 %v2226
        %v2247 = vunpack.c.l.b16 %v2227
        %v2248 = vunpack.c.h.b16 %v2224
        %v2249 = vunpack.c.h.b16 %v2225
        %v2250 = vunpack.c.h.b16 %v2226
        %v2251 = vunpack.c.h.b16 %v2227
        %v2252 = vpack.c.b16 %v2237, %v2236
        %v2253 = vpack.c.b16 %v2239, %v2238
        %v2254 = vpack.c.b16 %v2241, %v2240
        %v2255 = vpack.c.b16 %v2243, %v2242
        %v2256 = vpack.c.b16 %v2245, %v2244
        %v2257 = vpack.c.b16 %v2247, %v2246
        %v2258 = vpack.c.b16 %v2249, %v2248
        %v2259 = vpack.c.b16 %v2251, %v2250
        %2268 = vst [vmem:[%s963] sm:$0xff] %v2252
        %2269 = vst [vmem:[%s963 + $0x8] sm:$0xff] %v2253
        %2270 = vst [vmem:[%s963 + $0x10] sm:$0xff] %v2254
        %2271 = vst [vmem:[%s963 + $0x18] sm:$0xff] %v2255
        %2272 = vst [vmem:[%s963 + $0x20] sm:$0xff] %v2256
        %2273 = vst [vmem:[%s963 + $0x28] sm:$0xff] %v2257
        %2274 = vst [vmem:[%s963 + $0x30] sm:$0xff] %v2258
        %2275 = vst [vmem:[%s963 + $0x38] sm:$0xff] %v2259
        %s2276 = sand.u32 %s534, 1
        %s2277 = scalar_lea.sflag [#allocation4], %s2276
        %s2278 = sand.u32 %s534, 1
        %s2279 = smul.addr %s2278, 32
        %s2280 = scalar_lea.vmem [#allocation28], %s2279
        %s2281 = sand.u32 %s560, 1
        %s2282 = scalar_lea.sflag [#allocation30], %s2281
        %s2283 = sand.u32 %s560, 1
        %s2284 = smul.addr %s2283, 64
        %s2285 = scalar_lea.vmem [#allocation29], %s2284
        // Predicated region
        $region173: #{tpu_custom_call.1} parent=107 // pred_check
          %p2286 = pneg %p544
        $region174: #{tpu_custom_call.1} parent=107 // pred_check_branch
          %2288 = sbr.rel (%p2286) target = $region176
        $region175: #{tpu_custom_call.1} parent=107 // pred_region
          %s2289 = smul.u32 4, %s54
          %s2291 = ssub.s32 512, 512
          %2292 = vsyncadd %s2277, %s2291
          %s2293 = smul.addr %s2289, 128
          %s2294 = scalar_lea.hbm %s22, %s2293
          %s2295 = sshll.u32 %s2280, 4
          %s2296 = int_to_ptr.vmem [resolvable:$true] %s2295
          %2301 = dma.vmem_to_hbm [thread:$0]  %s2296, 512, %s2294, %s2277, 128, 128, 8
        $region176: #{tpu_custom_call.1} parent=107 // pred_fallthru
          _
        // Predicated region
        $region177: #{tpu_custom_call.1} parent=107 // pred_check
          %p2302 = pneg %p570
        $region178: #{tpu_custom_call.1} parent=107 // pred_check_branch
          %2304 = sbr.rel (%p2302) target = $region180
        $region179: #{tpu_custom_call.1} parent=107 // pred_region
          %s2305 = smul.u32 4, %s54
          %s2307 = ssub.s32 1024, 1024
          %2308 = vsyncadd %s2282, %s2307
          %s2309 = smul.addr %s2305, 4
          %s2310 = smul.addr %s2309, 64
          %s2311 = scalar_lea.hbm %s23, %s2310
          %s2312 = sshll.u32 %s2285, 4
          %s2313 = int_to_ptr.vmem [resolvable:$true] %s2312
          %2318 = dma.vmem_to_hbm [thread:$0]  %s2313, 1024, %s2311, %s2282, 256, 256, 16
        $region180: #{tpu_custom_call.1} parent=107 // pred_fallthru
          _
      $region108: #{tpu_custom_call.1} parent=5 // pred_fallthru
        _
      %p2319 = scmp.le.s32.totalorder 2, %s49
      // Predicated region
      $region181: #{tpu_custom_call.1} parent=5 // pred_check
        %p2320 = pneg %p2319
      $region182: #{tpu_custom_call.1} parent=5 // pred_check_branch
        %2322 = sbr.rel (%p2320) target = $region184
      $region183: #{tpu_custom_call.1} parent=5 // pred_region
        %s2323 = ssub.s32 %s49, 2
        // Predicated region
        $region185: #{tpu_custom_call.1} parent=183 // pred_check
          %p2324 = pneg %p550
        $region186: #{tpu_custom_call.1} parent=183 // pred_check_branch
          %2326 = sbr.rel (%p2324) target = $region188
        $region187: #{tpu_custom_call.1} parent=183 // pred_region
          %s2327 = sand.u32 %s535, 1
          %s2328 = scalar_lea.sflag [#allocation4], %s2327
          %s2329 = sand.u32 %s535, 1
          %s2330 = smul.addr %s2329, 32
          %s2331 = scalar_lea.vmem [#allocation28], %s2330
          %2332 = dma.done %s2328, 512
        $region188: #{tpu_custom_call.1} parent=183 // pred_fallthru
          _
        // Predicated region
        $region189: #{tpu_custom_call.1} parent=183 // pred_check
          %p2333 = pneg %p576
        $region190: #{tpu_custom_call.1} parent=183 // pred_check_branch
          %2335 = sbr.rel (%p2333) target = $region192
        $region191: #{tpu_custom_call.1} parent=183 // pred_region
          %s2336 = sand.u32 %s561, 1
          %s2337 = scalar_lea.sflag [#allocation30], %s2336
          %s2338 = sand.u32 %s561, 1
          %s2339 = smul.addr %s2338, 64
          %s2340 = scalar_lea.vmem [#allocation29], %s2339
          %2341 = dma.done %s2337, 1024
        $region192: #{tpu_custom_call.1} parent=183 // pred_fallthru
          _
      $region184: #{tpu_custom_call.1} parent=5 // pred_fallthru
        _
    $region6: #{tpu_custom_call.1} parent=1 // loop_footer
      %s53 = sadd.s32 1, %s49
    $region7: #{tpu_custom_call.1} parent=1 // loop_footer_branch
      %48 = sbr.rel target = $region3
    $region8: #{tpu_custom_call.1} parent=1 // loop_exit
      _
    %2342 = vsyncpa [#allocation3], 1
    %s2343 = scalar_lea.sflag [#allocation3], 1
    %2344 = vsyncpa %s2343, 1
    %2345 = vsyncpa [#allocation6], 1
    %s2346 = scalar_lea.sflag [#allocation6], 1
    %2347 = vsyncpa %s2346, 1
    %2348 = vsyncpa [#allocation9], 1
    %2349 = vsyncpa [#allocation12], 1
    %2350 = vsyncpa [#allocation15], 1
    %2351 = vsyncpa [#allocation18], 1
    %2352 = vsyncpa [#allocation21], 1
    %2353 = vsyncpa [#allocation24], 1
    %2354 = vsyncpa [#allocation27], 1
    %2355 = vsyncpa [#allocation4], 1
    %s2356 = scalar_lea.sflag [#allocation4], 1
    %2357 = vsyncpa %s2356, 1
    %2358 = vsyncpa [#allocation30], 1
    %s2359 = scalar_lea.sflag [#allocation30], 1
    %2360 = vsyncpa %s2359, 1

</llo_original>
